<compile_context>
chip_gen: v7x
topology: tpu7x:2x2x1
jax: 0.10.0
libtpu: 0.0.40
codegen_flags: <defaults>
</compile_context>

<pallas_src>
import math

import jax
import jax.numpy as jnp
from jax import lax
from jax.experimental import pallas as pl
from jax.experimental.pallas import tpu as pltpu

# ----------------------------- config (small) -----------------------------
EMB = 16          # config.embedding_size
HID = 32          # config.hidden_size
N_HEADS = 4       # config.num_attention_heads
HEAD_DIM = HID // N_HEADS
INTER = 64        # config.intermediate_size
N_LAYERS = 2      # config.num_hidden_layers
N_GROUPS = 1      # config.num_hidden_groups
INNER_GROUP = 1   # config.inner_group_num
LN_EPS = 1e-12    # config.layer_norm_eps
BATCH = 2
SEQ = 8

MM_DTYPE = jnp.bfloat16   # MXU operand dtype (accumulation stays f32)


# ------------------------------ kernel helpers ------------------------------
def _layer_norm(x, gamma, beta):
    mean = jnp.mean(x, axis=-1, keepdims=True)
    var = jnp.mean((x - mean) ** 2, axis=-1, keepdims=True)
    return (x - mean) * lax.rsqrt(var + LN_EPS) * gamma + beta


def _gelu_new(x):
    # HF ALBERT default hidden_act = "gelu_new" (tanh approximation) — EUP tanh.
    c = math.sqrt(2.0 / math.pi)
    return 0.5 * x * (1.0 + jnp.tanh(c * (x + 0.044715 * x * x * x)))


def _mm(a, b):
    # 2-D matmul, bf16 operands, f32 accumulation.
    return jnp.dot(a.astype(MM_DTYPE), b.astype(MM_DTYPE),
                   preferred_element_type=jnp.float32)


def _bmm(a, b, ca, cb):
    # Head-batched matmul: batch dim 0 on both operands, contract a[ca] x b[cb].
    return lax.dot_general(
        a.astype(MM_DTYPE), b.astype(MM_DTYPE),
        (((ca,), (cb,)), ((0,), (0,))),
        preferred_element_type=jnp.float32)


def _split_heads(x2d, col0):
    # Static lane slices of a fused projection result, stacked on a new leading
    # axis -> (N_HEADS, S, HEAD_DIM).  Only leading-dim manipulation; the tiled
    # (sublane, lane) dims are untouched.
    return jnp.stack(
        [x2d[:, col0 + i * HEAD_DIM: col0 + (i + 1) * HEAD_DIM]
         for i in range(N_HEADS)], axis=0)


# --------------------------------- kernel -----------------------------------
def _albert_forward_kernel(
    x_ref, emb_w_ref, emb_b_ref,
    wqkv_ref, bqkv_ref, wo_ref, bo_ref, g1_ref, b1_ref,
    wff_ref, bff_ref, wffo_ref, bffo_ref, g2_ref, b2_ref,
    o_ref,
):
    # One sequence per grid step: x_ref is (S, EMB), o_ref is (S, HID).

    # Read all (small, shared) weights ONCE, outside the unrolled layer loop.
    emb_w = emb_w_ref[...]
    emb_b = emb_b_ref[...]
    wqkv = wqkv_ref[...]       # (HID, 3*HID), Q columns pre-scaled by 1/sqrt(D)
    bqkv = bqkv_ref[...]       # (1, 3*HID)
    wo = wo_ref[...]           # (N_HEADS, HEAD_DIM, HID)
    bo = bo_ref[...]
    g1, b1 = g1_ref[...], b1_ref[...]
    wff, bff = wff_ref[...], bff_ref[...]
    wffo, bffo = wffo_ref[...], bffo_ref[...]
    g2, b2 = g2_ref[...], b2_ref[...]

    # Embedding -> hidden mapping (single full-width MXU matmul).
    h = _mm(x_ref[...], emb_w) + emb_b                       # (S, HID) f32

    def apply_layer(h):
        # ----- fused Q/K/V projection: one (S,HID) x (HID,3*HID) matmul -----
        qkv = _mm(h, wqkv) + bqkv                            # (S, 3*HID) f32
        qh = _split_heads(qkv, 0 * HID)                      # (NH, S, D)
        kh = _split_heads(qkv, 1 * HID)                      # (NH, S, D)
        vh = _split_heads(qkv, 2 * HID)                      # (NH, S, D)

        # ----- attention scores / softmax (per sequence, no mask needed) -----
        s = _bmm(qh, kh, 2, 2)                               # (NH, S, S)
        s = s - jnp.max(s, axis=-1, keepdims=True)
        p = jnp.exp(s)
        p = p * pl.reciprocal(jnp.sum(p, axis=-1, keepdims=True), approx=True)

        ctx = _bmm(p, vh, 2, 1)                              # (NH, S, D)

        # Out-projection: batched per-head matmul + leading-axis sum.
        # Mathematically identical to concat(ctx) @ Wo; kept in this form to
        # avoid a minor-dim relayout at these tiny shapes.
        # TODO(synk): at real HID, relayout ctx to (S, HID) and use one
        # full-width matmul here.
        proj = jnp.sum(_bmm(ctx, wo, 2, 1), axis=0) + bo     # (S, HID)

        h1 = _layer_norm(h + proj, g1, b1)

        # ----- feed-forward -----
        f = _mm(h1, wff) + bff                               # (S, INTER)
        f = _gelu_new(f)
        f = _mm(f, wffo) + bffo                              # (S, HID)
        return _layer_norm(h1 + f, g2, b2)

    def layer_step(i, h):
        # ALBERT weight sharing: N_GROUPS = INNER_GROUP = 1, so every one of
        # the N_LAYERS iterations applies the same VMEM-resident weights.
        del i
        return apply_layer(h)

    h = lax.fori_loop(0, N_LAYERS, layer_step, h, unroll=True)
    o_ref[...] = h.astype(o_ref.dtype)


# -------------------------------- wrapper ------------------------------------
@jax.jit
def albert_transformer_forward(hidden_states, params):
    B, S, E = hidden_states.shape

    def full_spec(a):
        # Whole (small) weight resident in VMEM; same block every grid step, so
        # Pallas fetches it once.
        return pl.BlockSpec(a.shape, lambda b, _nd=a.ndim: (0,) * _nd)

    inputs = (
        hidden_states,
        params["emb_w"], params["emb_b"],
        params["wqkv"], params["bqkv"], params["wo"], params["bo"],
        params["g1"], params["b1"],
        params["wff"], params["bff"], params["wffo"], params["bffo"],
        params["g2"], params["b2"],
    )
    in_specs = [pl.BlockSpec((None, S, E), lambda b: (b, 0, 0))]
    in_specs += [full_spec(a) for a in inputs[1:]]

    out = pl.pallas_call(
        _albert_forward_kernel,
        out_shape=jax.ShapeDtypeStruct((B, S, HID), jnp.float32),
        grid=(B,),
        in_specs=in_specs,
        out_specs=pl.BlockSpec((None, S, HID), lambda b: (b, 0, 0)),
        compiler_params=pltpu.CompilerParams(
            dimension_semantics=("parallel",)),
    )(*inputs)
    return out


# ------------------------------ parameters -----------------------------------
def init_params(key):
    keys = iter(jax.random.split(key, 8))

    def dense(kin, kout):
        w = jax.random.normal(next(keys), (kin, kout), jnp.float32) * 0.02
        b = jnp.zeros((1, kout), jnp.float32)
        return w, b

    emb_w, emb_b = dense(EMB, HID)
    wq, bq = dense(HID, HID)
    wk, bk = dense(HID, HID)
    wv, bv = dense(HID, HID)
    wo, bo = dense(HID, HID)
    wff, bff = dense(HID, INTER)
    wffo, bffo = dense(INTER, HID)

    # Fold 1/sqrt(HEAD_DIM) into the Q projection and fuse Q/K/V column-wise.
    scale = 1.0 / math.sqrt(HEAD_DIM)
    wqkv = jnp.concatenate([wq * scale, wk, wv], axis=1)     # (HID, 3*HID)
    bqkv = jnp.concatenate([bq * scale, bk, bv], axis=1)     # (1, 3*HID)
    wo3 = wo.reshape(N_HEADS, HEAD_DIM, HID)                 # (NH, D, HID)

    return {
        "emb_w": emb_w.astype(MM_DTYPE), "emb_b": emb_b,
        "wqkv": wqkv.astype(MM_DTYPE), "bqkv": bqkv,
        "wo": wo3.astype(MM_DTYPE), "bo": bo,
        "g1": jnp.ones((1, HID), jnp.float32),
        "b1": jnp.zeros((1, HID), jnp.float32),
        "wff": wff.astype(MM_DTYPE), "bff": bff,
        "wffo": wffo.astype(MM_DTYPE), "bffo": bffo,
        "g2": jnp.ones((1, HID), jnp.float32),
        "b2": jnp.zeros((1, HID), jnp.float32),
    }


# --------------------------------- main -------------------------------------
if __name__ == "__main__":
    key = jax.random.PRNGKey(0)
    pkey, xkey = jax.random.split(key)
    params = init_params(pkey)
    hidden_states = jax.random.normal(xkey, (BATCH, SEQ, EMB), jnp.float32)

    out = albert_transformer_forward(hidden_states, params)
    out = jax.block_until_ready(out)
    assert out.shape == (BATCH, SEQ, HID)
    assert bool(jnp.all(jnp.isfinite(out)))
    print("KERNEL_OK")
</pallas_src>

<mosaic_0001>
module attributes {stable_mosaic.version = 11 : i64} {
  func.func @_albert_forward_kernel(%arg0: i32, %arg1: memref<1x8x16xf32, #tpu.memory_space<vmem>>, %arg2: memref<16x32xbf16, #tpu.memory_space<vmem>>, %arg3: memref<1x32xf32, #tpu.memory_space<vmem>>, %arg4: memref<32x96xbf16, #tpu.memory_space<vmem>>, %arg5: memref<1x96xf32, #tpu.memory_space<vmem>>, %arg6: memref<4x8x32xbf16, #tpu.memory_space<vmem>>, %arg7: memref<1x32xf32, #tpu.memory_space<vmem>>, %arg8: memref<1x32xf32, #tpu.memory_space<vmem>>, %arg9: memref<1x32xf32, #tpu.memory_space<vmem>>, %arg10: memref<32x64xbf16, #tpu.memory_space<vmem>>, %arg11: memref<1x64xf32, #tpu.memory_space<vmem>>, %arg12: memref<64x32xbf16, #tpu.memory_space<vmem>>, %arg13: memref<1x32xf32, #tpu.memory_space<vmem>>, %arg14: memref<1x32xf32, #tpu.memory_space<vmem>>, %arg15: memref<1x32xf32, #tpu.memory_space<vmem>>, %arg16: memref<1x8x32xf32, #tpu.memory_space<vmem>>) attributes {dimension_semantics = [#tpu.dimension_semantics<parallel>], iteration_bounds = array<i64: 2>, scalar_prefetch = 0 : i64, scratch_operands = 0 : i64, tpu.core_type = #tpu.core_type<tc>, window_params = [{transform_indices = @transform_0, window_bounds = array<i64: 1, 8, 16>}, {pipeline_mode = #tpu.pipeline_mode<synchronous>, transform_indices = @transform_1, window_bounds = array<i64: 16, 32>}, {pipeline_mode = #tpu.pipeline_mode<synchronous>, transform_indices = @transform_2, window_bounds = array<i64: 1, 32>}, {pipeline_mode = #tpu.pipeline_mode<synchronous>, transform_indices = @transform_3, window_bounds = array<i64: 32, 96>}, {pipeline_mode = #tpu.pipeline_mode<synchronous>, transform_indices = @transform_4, window_bounds = array<i64: 1, 96>}, {pipeline_mode = #tpu.pipeline_mode<synchronous>, transform_indices = @transform_5, window_bounds = array<i64: 4, 8, 32>}, {pipeline_mode = #tpu.pipeline_mode<synchronous>, transform_indices = @transform_6, window_bounds = array<i64: 1, 32>}, {pipeline_mode = #tpu.pipeline_mode<synchronous>, transform_indices = @transform_7, window_bounds = array<i64: 1, 32>}, {pipeline_mode = #tpu.pipeline_mode<synchronous>, transform_indices = @transform_8, window_bounds = array<i64: 1, 32>}, {pipeline_mode = #tpu.pipeline_mode<synchronous>, transform_indices = @transform_9, window_bounds = array<i64: 32, 64>}, {pipeline_mode = #tpu.pipeline_mode<synchronous>, transform_indices = @transform_10, window_bounds = array<i64: 1, 64>}, {pipeline_mode = #tpu.pipeline_mode<synchronous>, transform_indices = @transform_11, window_bounds = array<i64: 64, 32>}, {pipeline_mode = #tpu.pipeline_mode<synchronous>, transform_indices = @transform_12, window_bounds = array<i64: 1, 32>}, {pipeline_mode = #tpu.pipeline_mode<synchronous>, transform_indices = @transform_13, window_bounds = array<i64: 1, 32>}, {pipeline_mode = #tpu.pipeline_mode<synchronous>, transform_indices = @transform_14, window_bounds = array<i64: 1, 32>}, {transform_indices = @transform_15, window_bounds = array<i64: 1, 8, 32>}]} {
    %c0 = arith.constant 0 : index
    %c0_0 = arith.constant 0 : index
    %0 = vector.load %arg2[%c0, %c0_0] : memref<16x32xbf16, #tpu.memory_space<vmem>>, vector<16x32xbf16>
    %c0_1 = arith.constant 0 : index
    %c0_2 = arith.constant 0 : index
    %1 = vector.load %arg3[%c0_1, %c0_2] : memref<1x32xf32, #tpu.memory_space<vmem>>, vector<1x32xf32>
    %c0_3 = arith.constant 0 : index
    %c0_4 = arith.constant 0 : index
    %2 = vector.load %arg4[%c0_3, %c0_4] : memref<32x96xbf16, #tpu.memory_space<vmem>>, vector<32x96xbf16>
    %c0_5 = arith.constant 0 : index
    %c0_6 = arith.constant 0 : index
    %3 = vector.load %arg5[%c0_5, %c0_6] : memref<1x96xf32, #tpu.memory_space<vmem>>, vector<1x96xf32>
    %c0_7 = arith.constant 0 : index
    %c0_8 = arith.constant 0 : index
    %c0_9 = arith.constant 0 : index
    %4 = vector.load %arg6[%c0_7, %c0_8, %c0_9] : memref<4x8x32xbf16, #tpu.memory_space<vmem>>, vector<4x8x32xbf16>
    %c0_10 = arith.constant 0 : index
    %c0_11 = arith.constant 0 : index
    %5 = vector.load %arg7[%c0_10, %c0_11] : memref<1x32xf32, #tpu.memory_space<vmem>>, vector<1x32xf32>
    %c0_12 = arith.constant 0 : index
    %c0_13 = arith.constant 0 : index
    %6 = vector.load %arg8[%c0_12, %c0_13] : memref<1x32xf32, #tpu.memory_space<vmem>>, vector<1x32xf32>
    %c0_14 = arith.constant 0 : index
    %c0_15 = arith.constant 0 : index
    %7 = vector.load %arg9[%c0_14, %c0_15] : memref<1x32xf32, #tpu.memory_space<vmem>>, vector<1x32xf32>
    %c0_16 = arith.constant 0 : index
    %c0_17 = arith.constant 0 : index
    %8 = vector.load %arg10[%c0_16, %c0_17] : memref<32x64xbf16, #tpu.memory_space<vmem>>, vector<32x64xbf16>
    %c0_18 = arith.constant 0 : index
    %c0_19 = arith.constant 0 : index
    %9 = vector.load %arg11[%c0_18, %c0_19] : memref<1x64xf32, #tpu.memory_space<vmem>>, vector<1x64xf32>
    %c0_20 = arith.constant 0 : index
    %c0_21 = arith.constant 0 : index
    %10 = vector.load %arg12[%c0_20, %c0_21] : memref<64x32xbf16, #tpu.memory_space<vmem>>, vector<64x32xbf16>
    %c0_22 = arith.constant 0 : index
    %c0_23 = arith.constant 0 : index
    %11 = vector.load %arg13[%c0_22, %c0_23] : memref<1x32xf32, #tpu.memory_space<vmem>>, vector<1x32xf32>
    %c0_24 = arith.constant 0 : index
    %c0_25 = arith.constant 0 : index
    %12 = vector.load %arg14[%c0_24, %c0_25] : memref<1x32xf32, #tpu.memory_space<vmem>>, vector<1x32xf32>
    %c0_26 = arith.constant 0 : index
    %c0_27 = arith.constant 0 : index
    %13 = vector.load %arg15[%c0_26, %c0_27] : memref<1x32xf32, #tpu.memory_space<vmem>>, vector<1x32xf32>
    %c0_28 = arith.constant 0 : index
    %c0_29 = arith.constant 0 : index
    %c0_30 = arith.constant 0 : index
    %14 = vector.load %arg1[%c0_28, %c0_29, %c0_30] : memref<1x8x16xf32, #tpu.memory_space<vmem>>, vector<1x8x16xf32>
    %15 = vector.shape_cast %14 : vector<1x8x16xf32> to vector<8x16xf32>
    %16 = arith.truncf %15 : vector<8x16xf32> to vector<8x16xbf16>
    %cst = arith.constant dense<0.000000e+00> : vector<8x32xf32>
    %17 = tpu.matmul %16, %0, %cst {dimension_numbers = #tpu.dot_dimension_numbers<[1], [0], [0], [1], [0, 0, 1, 1], [], []>} : vector<8x16xbf16>, vector<16x32xbf16>, vector<8x32xf32> -> vector<8x32xf32>
    %18 = vector.broadcast %1 : vector<1x32xf32> to vector<8x32xf32>
    %19 = arith.addf %17, %18 : vector<8x32xf32>
    %c0_i32 = arith.constant 0 : i32
    %20 = arith.truncf %19 : vector<8x32xf32> to vector<8x32xbf16>
    %cst_31 = arith.constant dense<0.000000e+00> : vector<8x96xf32>
    %21 = tpu.matmul %20, %2, %cst_31 {dimension_numbers = #tpu.dot_dimension_numbers<[1], [0], [0], [1], [0, 0, 1, 1], [], []>} : vector<8x32xbf16>, vector<32x96xbf16>, vector<8x96xf32> -> vector<8x96xf32>
    %22 = vector.broadcast %3 : vector<1x96xf32> to vector<8x96xf32>
    %23 = arith.addf %21, %22 : vector<8x96xf32>
    %24 = vector.extract_strided_slice %23 {offsets = [0, 0], sizes = [8, 8], strides = [1, 1]} : vector<8x96xf32> to vector<8x8xf32>
    %25 = vector.extract_strided_slice %23 {offsets = [0, 8], sizes = [8, 8], strides = [1, 1]} : vector<8x96xf32> to vector<8x8xf32>
    %26 = vector.extract_strided_slice %23 {offsets = [0, 16], sizes = [8, 8], strides = [1, 1]} : vector<8x96xf32> to vector<8x8xf32>
    %27 = vector.extract_strided_slice %23 {offsets = [0, 24], sizes = [8, 8], strides = [1, 1]} : vector<8x96xf32> to vector<8x8xf32>
    %28 = vector.shape_cast %24 : vector<8x8xf32> to vector<1x8x8xf32>
    %29 = vector.shape_cast %25 : vector<8x8xf32> to vector<1x8x8xf32>
    %30 = vector.shape_cast %26 : vector<8x8xf32> to vector<1x8x8xf32>
    %31 = vector.shape_cast %27 : vector<8x8xf32> to vector<1x8x8xf32>
    %32 = tpu.concatenate %28, %29, %30, %31 in 0 : vector<1x8x8xf32>, vector<1x8x8xf32>, vector<1x8x8xf32>, vector<1x8x8xf32> -> vector<4x8x8xf32>
    %33 = vector.extract_strided_slice %23 {offsets = [0, 32], sizes = [8, 8], strides = [1, 1]} : vector<8x96xf32> to vector<8x8xf32>
    %34 = vector.extract_strided_slice %23 {offsets = [0, 40], sizes = [8, 8], strides = [1, 1]} : vector<8x96xf32> to vector<8x8xf32>
    %35 = vector.extract_strided_slice %23 {offsets = [0, 48], sizes = [8, 8], strides = [1, 1]} : vector<8x96xf32> to vector<8x8xf32>
    %36 = vector.extract_strided_slice %23 {offsets = [0, 56], sizes = [8, 8], strides = [1, 1]} : vector<8x96xf32> to vector<8x8xf32>
    %37 = vector.shape_cast %33 : vector<8x8xf32> to vector<1x8x8xf32>
    %38 = vector.shape_cast %34 : vector<8x8xf32> to vector<1x8x8xf32>
    %39 = vector.shape_cast %35 : vector<8x8xf32> to vector<1x8x8xf32>
    %40 = vector.shape_cast %36 : vector<8x8xf32> to vector<1x8x8xf32>
    %41 = tpu.concatenate %37, %38, %39, %40 in 0 : vector<1x8x8xf32>, vector<1x8x8xf32>, vector<1x8x8xf32>, vector<1x8x8xf32> -> vector<4x8x8xf32>
    %42 = vector.extract_strided_slice %23 {offsets = [0, 64], sizes = [8, 8], strides = [1, 1]} : vector<8x96xf32> to vector<8x8xf32>
    %43 = vector.extract_strided_slice %23 {offsets = [0, 72], sizes = [8, 8], strides = [1, 1]} : vector<8x96xf32> to vector<8x8xf32>
    %44 = vector.extract_strided_slice %23 {offsets = [0, 80], sizes = [8, 8], strides = [1, 1]} : vector<8x96xf32> to vector<8x8xf32>
    %45 = vector.extract_strided_slice %23 {offsets = [0, 88], sizes = [8, 8], strides = [1, 1]} : vector<8x96xf32> to vector<8x8xf32>
    %46 = vector.shape_cast %42 : vector<8x8xf32> to vector<1x8x8xf32>
    %47 = vector.shape_cast %43 : vector<8x8xf32> to vector<1x8x8xf32>
    %48 = vector.shape_cast %44 : vector<8x8xf32> to vector<1x8x8xf32>
    %49 = vector.shape_cast %45 : vector<8x8xf32> to vector<1x8x8xf32>
    %50 = tpu.concatenate %46, %47, %48, %49 in 0 : vector<1x8x8xf32>, vector<1x8x8xf32>, vector<1x8x8xf32>, vector<1x8x8xf32> -> vector<4x8x8xf32>
    %51 = arith.truncf %32 : vector<4x8x8xf32> to vector<4x8x8xbf16>
    %52 = arith.truncf %41 : vector<4x8x8xf32> to vector<4x8x8xbf16>
    %cst_32 = arith.constant dense<0.000000e+00> : vector<4x8x8xf32>
    %53 = tpu.matmul %51, %52, %cst_32 {dimension_numbers = #tpu.dot_dimension_numbers<[2], [2], [1], [1], [0, 0, 0, 1, 1, 1], [0], [0]>} : vector<4x8x8xbf16>, vector<4x8x8xbf16>, vector<4x8x8xf32> -> vector<4x8x8xf32>
    %cst_33 = arith.constant dense<0xFF800000> : vector<4x8xf32>
    %54 = vector.multi_reduction <maximumf>, %53, %cst_33 [2] : vector<4x8x8xf32> to vector<4x8xf32>
    %55 = vector.shape_cast %54 : vector<4x8xf32> to vector<4x8x1xf32>
    %56 = vector.broadcast %55 : vector<4x8x1xf32> to vector<4x8x8xf32>
    %57 = arith.subf %53, %56 : vector<4x8x8xf32>
    %58 = math.exp %57 : vector<4x8x8xf32>
    %cst_34 = arith.constant dense<0.000000e+00> : vector<4x8xf32>
    %59 = vector.multi_reduction <add>, %58, %cst_34 [2] : vector<4x8x8xf32> to vector<4x8xf32>
    %60 = vector.shape_cast %59 : vector<4x8xf32> to vector<4x8x1xf32>
    %61 = tpu.reciprocal %60 {approx = true} : vector<4x8x1xf32> -> vector<4x8x1xf32>
    %62 = vector.broadcast %61 : vector<4x8x1xf32> to vector<4x8x8xf32>
    %63 = arith.mulf %58, %62 : vector<4x8x8xf32>
    %64 = arith.truncf %63 : vector<4x8x8xf32> to vector<4x8x8xbf16>
    %65 = arith.truncf %50 : vector<4x8x8xf32> to vector<4x8x8xbf16>
    %cst_35 = arith.constant dense<0.000000e+00> : vector<4x8x8xf32>
    %66 = tpu.matmul %64, %65, %cst_35 {dimension_numbers = #tpu.dot_dimension_numbers<[2], [1], [1], [2], [0, 0, 0, 1, 1, 2], [0], [0]>} : vector<4x8x8xbf16>, vector<4x8x8xbf16>, vector<4x8x8xf32> -> vector<4x8x8xf32>
    %67 = arith.truncf %66 : vector<4x8x8xf32> to vector<4x8x8xbf16>
    %cst_36 = arith.constant dense<0.000000e+00> : vector<4x8x32xf32>
    %68 = tpu.matmul %67, %4, %cst_36 {dimension_numbers = #tpu.dot_dimension_numbers<[2], [1], [1], [2], [0, 0, 0, 1, 1, 2], [0], [0]>} : vector<4x8x8xbf16>, vector<4x8x32xbf16>, vector<4x8x32xf32> -> vector<4x8x32xf32>
    %cst_37 = arith.constant dense<0.000000e+00> : vector<8x32xf32>
    %69 = vector.multi_reduction <add>, %68, %cst_37 [0] : vector<4x8x32xf32> to vector<8x32xf32>
    %70 = vector.broadcast %5 : vector<1x32xf32> to vector<8x32xf32>
    %71 = arith.addf %69, %70 : vector<8x32xf32>
    %72 = arith.addf %19, %71 : vector<8x32xf32>
    %cst_38 = arith.constant dense<0.000000e+00> : vector<8xf32>
    %73 = vector.multi_reduction <add>, %72, %cst_38 [1] : vector<8x32xf32> to vector<8xf32>
    %74 = vector.shape_cast %73 : vector<8xf32> to vector<8x1xf32>
    %cst_39 = arith.constant 3.200000e+01 : f32
    %75 = vector.broadcast %cst_39 : f32 to vector<8x1xf32>
    %76 = arith.divf %74, %75 : vector<8x1xf32>
    %77 = vector.broadcast %76 : vector<8x1xf32> to vector<8x32xf32>
    %78 = arith.subf %72, %77 : vector<8x32xf32>
    %79 = arith.mulf %78, %78 : vector<8x32xf32>
    %cst_40 = arith.constant dense<0.000000e+00> : vector<8xf32>
    %80 = vector.multi_reduction <add>, %79, %cst_40 [1] : vector<8x32xf32> to vector<8xf32>
    %81 = vector.shape_cast %80 : vector<8xf32> to vector<8x1xf32>
    %cst_41 = arith.constant 3.200000e+01 : f32
    %82 = vector.broadcast %cst_41 : f32 to vector<8x1xf32>
    %83 = arith.divf %81, %82 : vector<8x1xf32>
    %84 = vector.broadcast %76 : vector<8x1xf32> to vector<8x32xf32>
    %85 = arith.subf %72, %84 : vector<8x32xf32>
    %cst_42 = arith.constant 9.99999996E-13 : f32
    %86 = vector.broadcast %cst_42 : f32 to vector<8x1xf32>
    %87 = arith.addf %83, %86 : vector<8x1xf32>
    %88 = math.rsqrt %87 : vector<8x1xf32>
    %89 = vector.broadcast %88 : vector<8x1xf32> to vector<8x32xf32>
    %90 = arith.mulf %85, %89 : vector<8x32xf32>
    %91 = vector.broadcast %6 : vector<1x32xf32> to vector<8x32xf32>
    %92 = arith.mulf %90, %91 : vector<8x32xf32>
    %93 = vector.broadcast %7 : vector<1x32xf32> to vector<8x32xf32>
    %94 = arith.addf %92, %93 : vector<8x32xf32>
    %95 = arith.truncf %94 : vector<8x32xf32> to vector<8x32xbf16>
    %cst_43 = arith.constant dense<0.000000e+00> : vector<8x64xf32>
    %96 = tpu.matmul %95, %8, %cst_43 {dimension_numbers = #tpu.dot_dimension_numbers<[1], [0], [0], [1], [0, 0, 1, 1], [], []>} : vector<8x32xbf16>, vector<32x64xbf16>, vector<8x64xf32> -> vector<8x64xf32>
    %97 = vector.broadcast %9 : vector<1x64xf32> to vector<8x64xf32>
    %98 = arith.addf %96, %97 : vector<8x64xf32>
    %cst_44 = arith.constant 5.000000e-01 : f32
    %99 = vector.broadcast %cst_44 : f32 to vector<8x64xf32>
    %100 = arith.mulf %99, %98 : vector<8x64xf32>
    %cst_45 = arith.constant 4.471500e-02 : f32
    %101 = vector.broadcast %cst_45 : f32 to vector<8x64xf32>
    %102 = arith.mulf %101, %98 : vector<8x64xf32>
    %103 = arith.mulf %102, %98 : vector<8x64xf32>
    %104 = arith.mulf %103, %98 : vector<8x64xf32>
    %105 = arith.addf %98, %104 : vector<8x64xf32>
    %cst_46 = arith.constant 0.797884583 : f32
    %106 = vector.broadcast %cst_46 : f32 to vector<8x64xf32>
    %107 = arith.mulf %106, %105 : vector<8x64xf32>
    %108 = math.tanh %107 : vector<8x64xf32>
    %cst_47 = arith.constant 1.000000e+00 : f32
    %109 = vector.broadcast %cst_47 : f32 to vector<8x64xf32>
    %110 = arith.addf %109, %108 : vector<8x64xf32>
    %111 = arith.mulf %100, %110 : vector<8x64xf32>
    %112 = arith.truncf %111 : vector<8x64xf32> to vector<8x64xbf16>
    %cst_48 = arith.constant dense<0.000000e+00> : vector<8x32xf32>
    %113 = tpu.matmul %112, %10, %cst_48 {dimension_numbers = #tpu.dot_dimension_numbers<[1], [0], [0], [1], [0, 0, 1, 1], [], []>} : vector<8x64xbf16>, vector<64x32xbf16>, vector<8x32xf32> -> vector<8x32xf32>
    %114 = vector.broadcast %11 : vector<1x32xf32> to vector<8x32xf32>
    %115 = arith.addf %113, %114 : vector<8x32xf32>
    %116 = arith.addf %94, %115 : vector<8x32xf32>
    %cst_49 = arith.constant dense<0.000000e+00> : vector<8xf32>
    %117 = vector.multi_reduction <add>, %116, %cst_49 [1] : vector<8x32xf32> to vector<8xf32>
    %118 = vector.shape_cast %117 : vector<8xf32> to vector<8x1xf32>
    %cst_50 = arith.constant 3.200000e+01 : f32
    %119 = vector.broadcast %cst_50 : f32 to vector<8x1xf32>
    %120 = arith.divf %118, %119 : vector<8x1xf32>
    %121 = vector.broadcast %120 : vector<8x1xf32> to vector<8x32xf32>
    %122 = arith.subf %116, %121 : vector<8x32xf32>
    %123 = arith.mulf %122, %122 : vector<8x32xf32>
    %cst_51 = arith.constant dense<0.000000e+00> : vector<8xf32>
    %124 = vector.multi_reduction <add>, %123, %cst_51 [1] : vector<8x32xf32> to vector<8xf32>
    %125 = vector.shape_cast %124 : vector<8xf32> to vector<8x1xf32>
    %cst_52 = arith.constant 3.200000e+01 : f32
    %126 = vector.broadcast %cst_52 : f32 to vector<8x1xf32>
    %127 = arith.divf %125, %126 : vector<8x1xf32>
    %128 = vector.broadcast %120 : vector<8x1xf32> to vector<8x32xf32>
    %129 = arith.subf %116, %128 : vector<8x32xf32>
    %cst_53 = arith.constant 9.99999996E-13 : f32
    %130 = vector.broadcast %cst_53 : f32 to vector<8x1xf32>
    %131 = arith.addf %127, %130 : vector<8x1xf32>
    %132 = math.rsqrt %131 : vector<8x1xf32>
    %133 = vector.broadcast %132 : vector<8x1xf32> to vector<8x32xf32>
    %134 = arith.mulf %129, %133 : vector<8x32xf32>
    %135 = vector.broadcast %12 : vector<1x32xf32> to vector<8x32xf32>
    %136 = arith.mulf %134, %135 : vector<8x32xf32>
    %137 = vector.broadcast %13 : vector<1x32xf32> to vector<8x32xf32>
    %138 = arith.addf %136, %137 : vector<8x32xf32>
    %c1_i32 = arith.constant 1 : i32
    %139 = arith.truncf %138 : vector<8x32xf32> to vector<8x32xbf16>
    %cst_54 = arith.constant dense<0.000000e+00> : vector<8x96xf32>
    %140 = tpu.matmul %139, %2, %cst_54 {dimension_numbers = #tpu.dot_dimension_numbers<[1], [0], [0], [1], [0, 0, 1, 1], [], []>} : vector<8x32xbf16>, vector<32x96xbf16>, vector<8x96xf32> -> vector<8x96xf32>
    %141 = vector.broadcast %3 : vector<1x96xf32> to vector<8x96xf32>
    %142 = arith.addf %140, %141 : vector<8x96xf32>
    %143 = vector.extract_strided_slice %142 {offsets = [0, 0], sizes = [8, 8], strides = [1, 1]} : vector<8x96xf32> to vector<8x8xf32>
    %144 = vector.extract_strided_slice %142 {offsets = [0, 8], sizes = [8, 8], strides = [1, 1]} : vector<8x96xf32> to vector<8x8xf32>
    %145 = vector.extract_strided_slice %142 {offsets = [0, 16], sizes = [8, 8], strides = [1, 1]} : vector<8x96xf32> to vector<8x8xf32>
    %146 = vector.extract_strided_slice %142 {offsets = [0, 24], sizes = [8, 8], strides = [1, 1]} : vector<8x96xf32> to vector<8x8xf32>
    %147 = vector.shape_cast %143 : vector<8x8xf32> to vector<1x8x8xf32>
    %148 = vector.shape_cast %144 : vector<8x8xf32> to vector<1x8x8xf32>
    %149 = vector.shape_cast %145 : vector<8x8xf32> to vector<1x8x8xf32>
    %150 = vector.shape_cast %146 : vector<8x8xf32> to vector<1x8x8xf32>
    %151 = tpu.concatenate %147, %148, %149, %150 in 0 : vector<1x8x8xf32>, vector<1x8x8xf32>, vector<1x8x8xf32>, vector<1x8x8xf32> -> vector<4x8x8xf32>
    %152 = vector.extract_strided_slice %142 {offsets = [0, 32], sizes = [8, 8], strides = [1, 1]} : vector<8x96xf32> to vector<8x8xf32>
    %153 = vector.extract_strided_slice %142 {offsets = [0, 40], sizes = [8, 8], strides = [1, 1]} : vector<8x96xf32> to vector<8x8xf32>
    %154 = vector.extract_strided_slice %142 {offsets = [0, 48], sizes = [8, 8], strides = [1, 1]} : vector<8x96xf32> to vector<8x8xf32>
    %155 = vector.extract_strided_slice %142 {offsets = [0, 56], sizes = [8, 8], strides = [1, 1]} : vector<8x96xf32> to vector<8x8xf32>
    %156 = vector.shape_cast %152 : vector<8x8xf32> to vector<1x8x8xf32>
    %157 = vector.shape_cast %153 : vector<8x8xf32> to vector<1x8x8xf32>
    %158 = vector.shape_cast %154 : vector<8x8xf32> to vector<1x8x8xf32>
    %159 = vector.shape_cast %155 : vector<8x8xf32> to vector<1x8x8xf32>
    %160 = tpu.concatenate %156, %157, %158, %159 in 0 : vector<1x8x8xf32>, vector<1x8x8xf32>, vector<1x8x8xf32>, vector<1x8x8xf32> -> vector<4x8x8xf32>
    %161 = vector.extract_strided_slice %142 {offsets = [0, 64], sizes = [8, 8], strides = [1, 1]} : vector<8x96xf32> to vector<8x8xf32>
    %162 = vector.extract_strided_slice %142 {offsets = [0, 72], sizes = [8, 8], strides = [1, 1]} : vector<8x96xf32> to vector<8x8xf32>
    %163 = vector.extract_strided_slice %142 {offsets = [0, 80], sizes = [8, 8], strides = [1, 1]} : vector<8x96xf32> to vector<8x8xf32>
    %164 = vector.extract_strided_slice %142 {offsets = [0, 88], sizes = [8, 8], strides = [1, 1]} : vector<8x96xf32> to vector<8x8xf32>
    %165 = vector.shape_cast %161 : vector<8x8xf32> to vector<1x8x8xf32>
    %166 = vector.shape_cast %162 : vector<8x8xf32> to vector<1x8x8xf32>
    %167 = vector.shape_cast %163 : vector<8x8xf32> to vector<1x8x8xf32>
    %168 = vector.shape_cast %164 : vector<8x8xf32> to vector<1x8x8xf32>
    %169 = tpu.concatenate %165, %166, %167, %168 in 0 : vector<1x8x8xf32>, vector<1x8x8xf32>, vector<1x8x8xf32>, vector<1x8x8xf32> -> vector<4x8x8xf32>
    %170 = arith.truncf %151 : vector<4x8x8xf32> to vector<4x8x8xbf16>
    %171 = arith.truncf %160 : vector<4x8x8xf32> to vector<4x8x8xbf16>
    %cst_55 = arith.constant dense<0.000000e+00> : vector<4x8x8xf32>
    %172 = tpu.matmul %170, %171, %cst_55 {dimension_numbers = #tpu.dot_dimension_numbers<[2], [2], [1], [1], [0, 0, 0, 1, 1, 1], [0], [0]>} : vector<4x8x8xbf16>, vector<4x8x8xbf16>, vector<4x8x8xf32> -> vector<4x8x8xf32>
    %cst_56 = arith.constant dense<0xFF800000> : vector<4x8xf32>
    %173 = vector.multi_reduction <maximumf>, %172, %cst_56 [2] : vector<4x8x8xf32> to vector<4x8xf32>
    %174 = vector.shape_cast %173 : vector<4x8xf32> to vector<4x8x1xf32>
    %175 = vector.broadcast %174 : vector<4x8x1xf32> to vector<4x8x8xf32>
    %176 = arith.subf %172, %175 : vector<4x8x8xf32>
    %177 = math.exp %176 : vector<4x8x8xf32>
    %cst_57 = arith.constant dense<0.000000e+00> : vector<4x8xf32>
    %178 = vector.multi_reduction <add>, %177, %cst_57 [2] : vector<4x8x8xf32> to vector<4x8xf32>
    %179 = vector.shape_cast %178 : vector<4x8xf32> to vector<4x8x1xf32>
    %180 = tpu.reciprocal %179 {approx = true} : vector<4x8x1xf32> -> vector<4x8x1xf32>
    %181 = vector.broadcast %180 : vector<4x8x1xf32> to vector<4x8x8xf32>
    %182 = arith.mulf %177, %181 : vector<4x8x8xf32>
    %183 = arith.truncf %182 : vector<4x8x8xf32> to vector<4x8x8xbf16>
    %184 = arith.truncf %169 : vector<4x8x8xf32> to vector<4x8x8xbf16>
    %cst_58 = arith.constant dense<0.000000e+00> : vector<4x8x8xf32>
    %185 = tpu.matmul %183, %184, %cst_58 {dimension_numbers = #tpu.dot_dimension_numbers<[2], [1], [1], [2], [0, 0, 0, 1, 1, 2], [0], [0]>} : vector<4x8x8xbf16>, vector<4x8x8xbf16>, vector<4x8x8xf32> -> vector<4x8x8xf32>
    %186 = arith.truncf %185 : vector<4x8x8xf32> to vector<4x8x8xbf16>
    %cst_59 = arith.constant dense<0.000000e+00> : vector<4x8x32xf32>
    %187 = tpu.matmul %186, %4, %cst_59 {dimension_numbers = #tpu.dot_dimension_numbers<[2], [1], [1], [2], [0, 0, 0, 1, 1, 2], [0], [0]>} : vector<4x8x8xbf16>, vector<4x8x32xbf16>, vector<4x8x32xf32> -> vector<4x8x32xf32>
    %cst_60 = arith.constant dense<0.000000e+00> : vector<8x32xf32>
    %188 = vector.multi_reduction <add>, %187, %cst_60 [0] : vector<4x8x32xf32> to vector<8x32xf32>
    %189 = vector.broadcast %5 : vector<1x32xf32> to vector<8x32xf32>
    %190 = arith.addf %188, %189 : vector<8x32xf32>
    %191 = arith.addf %138, %190 : vector<8x32xf32>
    %cst_61 = arith.constant dense<0.000000e+00> : vector<8xf32>
    %192 = vector.multi_reduction <add>, %191, %cst_61 [1] : vector<8x32xf32> to vector<8xf32>
    %193 = vector.shape_cast %192 : vector<8xf32> to vector<8x1xf32>
    %cst_62 = arith.constant 3.200000e+01 : f32
    %194 = vector.broadcast %cst_62 : f32 to vector<8x1xf32>
    %195 = arith.divf %193, %194 : vector<8x1xf32>
    %196 = vector.broadcast %195 : vector<8x1xf32> to vector<8x32xf32>
    %197 = arith.subf %191, %196 : vector<8x32xf32>
    %198 = arith.mulf %197, %197 : vector<8x32xf32>
    %cst_63 = arith.constant dense<0.000000e+00> : vector<8xf32>
    %199 = vector.multi_reduction <add>, %198, %cst_63 [1] : vector<8x32xf32> to vector<8xf32>
    %200 = vector.shape_cast %199 : vector<8xf32> to vector<8x1xf32>
    %cst_64 = arith.constant 3.200000e+01 : f32
    %201 = vector.broadcast %cst_64 : f32 to vector<8x1xf32>
    %202 = arith.divf %200, %201 : vector<8x1xf32>
    %203 = vector.broadcast %195 : vector<8x1xf32> to vector<8x32xf32>
    %204 = arith.subf %191, %203 : vector<8x32xf32>
    %cst_65 = arith.constant 9.99999996E-13 : f32
    %205 = vector.broadcast %cst_65 : f32 to vector<8x1xf32>
    %206 = arith.addf %202, %205 : vector<8x1xf32>
    %207 = math.rsqrt %206 : vector<8x1xf32>
    %208 = vector.broadcast %207 : vector<8x1xf32> to vector<8x32xf32>
    %209 = arith.mulf %204, %208 : vector<8x32xf32>
    %210 = vector.broadcast %6 : vector<1x32xf32> to vector<8x32xf32>
    %211 = arith.mulf %209, %210 : vector<8x32xf32>
    %212 = vector.broadcast %7 : vector<1x32xf32> to vector<8x32xf32>
    %213 = arith.addf %211, %212 : vector<8x32xf32>
    %214 = arith.truncf %213 : vector<8x32xf32> to vector<8x32xbf16>
    %cst_66 = arith.constant dense<0.000000e+00> : vector<8x64xf32>
    %215 = tpu.matmul %214, %8, %cst_66 {dimension_numbers = #tpu.dot_dimension_numbers<[1], [0], [0], [1], [0, 0, 1, 1], [], []>} : vector<8x32xbf16>, vector<32x64xbf16>, vector<8x64xf32> -> vector<8x64xf32>
    %216 = vector.broadcast %9 : vector<1x64xf32> to vector<8x64xf32>
    %217 = arith.addf %215, %216 : vector<8x64xf32>
    %cst_67 = arith.constant 5.000000e-01 : f32
    %218 = vector.broadcast %cst_67 : f32 to vector<8x64xf32>
    %219 = arith.mulf %218, %217 : vector<8x64xf32>
    %cst_68 = arith.constant 4.471500e-02 : f32
    %220 = vector.broadcast %cst_68 : f32 to vector<8x64xf32>
    %221 = arith.mulf %220, %217 : vector<8x64xf32>
    %222 = arith.mulf %221, %217 : vector<8x64xf32>
    %223 = arith.mulf %222, %217 : vector<8x64xf32>
    %224 = arith.addf %217, %223 : vector<8x64xf32>
    %cst_69 = arith.constant 0.797884583 : f32
    %225 = vector.broadcast %cst_69 : f32 to vector<8x64xf32>
    %226 = arith.mulf %225, %224 : vector<8x64xf32>
    %227 = math.tanh %226 : vector<8x64xf32>
    %cst_70 = arith.constant 1.000000e+00 : f32
    %228 = vector.broadcast %cst_70 : f32 to vector<8x64xf32>
    %229 = arith.addf %228, %227 : vector<8x64xf32>
    %230 = arith.mulf %219, %229 : vector<8x64xf32>
    %231 = arith.truncf %230 : vector<8x64xf32> to vector<8x64xbf16>
    %cst_71 = arith.constant dense<0.000000e+00> : vector<8x32xf32>
    %232 = tpu.matmul %231, %10, %cst_71 {dimension_numbers = #tpu.dot_dimension_numbers<[1], [0], [0], [1], [0, 0, 1, 1], [], []>} : vector<8x64xbf16>, vector<64x32xbf16>, vector<8x32xf32> -> vector<8x32xf32>
    %233 = vector.broadcast %11 : vector<1x32xf32> to vector<8x32xf32>
    %234 = arith.addf %232, %233 : vector<8x32xf32>
    %235 = arith.addf %213, %234 : vector<8x32xf32>
    %cst_72 = arith.constant dense<0.000000e+00> : vector<8xf32>
    %236 = vector.multi_reduction <add>, %235, %cst_72 [1] : vector<8x32xf32> to vector<8xf32>
    %237 = vector.shape_cast %236 : vector<8xf32> to vector<8x1xf32>
    %cst_73 = arith.constant 3.200000e+01 : f32
    %238 = vector.broadcast %cst_73 : f32 to vector<8x1xf32>
    %239 = arith.divf %237, %238 : vector<8x1xf32>
    %240 = vector.broadcast %239 : vector<8x1xf32> to vector<8x32xf32>
    %241 = arith.subf %235, %240 : vector<8x32xf32>
    %242 = arith.mulf %241, %241 : vector<8x32xf32>
    %cst_74 = arith.constant dense<0.000000e+00> : vector<8xf32>
    %243 = vector.multi_reduction <add>, %242, %cst_74 [1] : vector<8x32xf32> to vector<8xf32>
    %244 = vector.shape_cast %243 : vector<8xf32> to vector<8x1xf32>
    %cst_75 = arith.constant 3.200000e+01 : f32
    %245 = vector.broadcast %cst_75 : f32 to vector<8x1xf32>
    %246 = arith.divf %244, %245 : vector<8x1xf32>
    %247 = vector.broadcast %239 : vector<8x1xf32> to vector<8x32xf32>
    %248 = arith.subf %235, %247 : vector<8x32xf32>
    %cst_76 = arith.constant 9.99999996E-13 : f32
    %249 = vector.broadcast %cst_76 : f32 to vector<8x1xf32>
    %250 = arith.addf %246, %249 : vector<8x1xf32>
    %251 = math.rsqrt %250 : vector<8x1xf32>
    %252 = vector.broadcast %251 : vector<8x1xf32> to vector<8x32xf32>
    %253 = arith.mulf %248, %252 : vector<8x32xf32>
    %254 = vector.broadcast %12 : vector<1x32xf32> to vector<8x32xf32>
    %255 = arith.mulf %253, %254 : vector<8x32xf32>
    %256 = vector.broadcast %13 : vector<1x32xf32> to vector<8x32xf32>
    %257 = arith.addf %255, %256 : vector<8x32xf32>
    %c0_77 = arith.constant 0 : index
    %c0_78 = arith.constant 0 : index
    %c0_79 = arith.constant 0 : index
    %258 = vector.load %arg16[%c0_77, %c0_78, %c0_79] : memref<1x8x32xf32, #tpu.memory_space<vmem>>, vector<1x8x32xf32>
    %259 = vector.shape_cast %258 : vector<1x8x32xf32> to vector<8x32xf32>
    %260 = vector.shape_cast %257 : vector<8x32xf32> to vector<1x8x32xf32>
    tpu.vector_store %arg16[%c0_77, %c0_78, %c0_79], %260 {strides = array<i32>} : memref<1x8x32xf32, #tpu.memory_space<vmem>>, vector<1x8x32xf32>,
    return
  }
  func.func @transform_0(%arg0: i32) -> (i32, i32, i32) {
    %c0_i32 = arith.constant 0 : i32
    %c0_i32_0 = arith.constant 0 : i32
    %c0_i32_1 = arith.constant 0 : i32
    return %arg0, %c0_i32, %c0_i32_0 : i32, i32, i32
  }
  func.func @transform_1(%arg0: i32) -> (i32, i32) {
    %c0_i32 = arith.constant 0 : i32
    %c0_i32_0 = arith.constant 0 : i32
    %c0_i32_1 = arith.constant 0 : i32
    return %c0_i32, %c0_i32_0 : i32, i32
  }
  func.func @transform_2(%arg0: i32) -> (i32, i32) {
    %c0_i32 = arith.constant 0 : i32
    %c0_i32_0 = arith.constant 0 : i32
    %c0_i32_1 = arith.constant 0 : i32
    return %c0_i32, %c0_i32_0 : i32, i32
  }
  func.func @transform_3(%arg0: i32) -> (i32, i32) {
    %c0_i32 = arith.constant 0 : i32
    %c0_i32_0 = arith.constant 0 : i32
    %c0_i32_1 = arith.constant 0 : i32
    return %c0_i32, %c0_i32_0 : i32, i32
  }
  func.func @transform_4(%arg0: i32) -> (i32, i32) {
    %c0_i32 = arith.constant 0 : i32
    %c0_i32_0 = arith.constant 0 : i32
    %c0_i32_1 = arith.constant 0 : i32
    return %c0_i32, %c0_i32_0 : i32, i32
  }
  func.func @transform_5(%arg0: i32) -> (i32, i32, i32) {
    %c0_i32 = arith.constant 0 : i32
    %c0_i32_0 = arith.constant 0 : i32
    %c0_i32_1 = arith.constant 0 : i32
    %c0_i32_2 = arith.constant 0 : i32
    return %c0_i32, %c0_i32_0, %c0_i32_1 : i32, i32, i32
  }
  func.func @transform_6(%arg0: i32) -> (i32, i32) {
    %c0_i32 = arith.constant 0 : i32
    %c0_i32_0 = arith.constant 0 : i32
    %c0_i32_1 = arith.constant 0 : i32
    return %c0_i32, %c0_i32_0 : i32, i32
  }
  func.func @transform_7(%arg0: i32) -> (i32, i32) {
    %c0_i32 = arith.constant 0 : i32
    %c0_i32_0 = arith.constant 0 : i32
    %c0_i32_1 = arith.constant 0 : i32
    return %c0_i32, %c0_i32_0 : i32, i32
  }
  func.func @transform_8(%arg0: i32) -> (i32, i32) {
    %c0_i32 = arith.constant 0 : i32
    %c0_i32_0 = arith.constant 0 : i32
    %c0_i32_1 = arith.constant 0 : i32
    return %c0_i32, %c0_i32_0 : i32, i32
  }
  func.func @transform_9(%arg0: i32) -> (i32, i32) {
    %c0_i32 = arith.constant 0 : i32
    %c0_i32_0 = arith.constant 0 : i32
    %c0_i32_1 = arith.constant 0 : i32
    return %c0_i32, %c0_i32_0 : i32, i32
  }
  func.func @transform_10(%arg0: i32) -> (i32, i32) {
    %c0_i32 = arith.constant 0 : i32
    %c0_i32_0 = arith.constant 0 : i32
    %c0_i32_1 = arith.constant 0 : i32
    return %c0_i32, %c0_i32_0 : i32, i32
  }
  func.func @transform_11(%arg0: i32) -> (i32, i32) {
    %c0_i32 = arith.constant 0 : i32
    %c0_i32_0 = arith.constant 0 : i32
    %c0_i32_1 = arith.constant 0 : i32
    return %c0_i32, %c0_i32_0 : i32, i32
  }
  func.func @transform_12(%arg0: i32) -> (i32, i32) {
    %c0_i32 = arith.constant 0 : i32
    %c0_i32_0 = arith.constant 0 : i32
    %c0_i32_1 = arith.constant 0 : i32
    return %c0_i32, %c0_i32_0 : i32, i32
  }
  func.func @transform_13(%arg0: i32) -> (i32, i32) {
    %c0_i32 = arith.constant 0 : i32
    %c0_i32_0 = arith.constant 0 : i32
    %c0_i32_1 = arith.constant 0 : i32
    return %c0_i32, %c0_i32_0 : i32, i32
  }
  func.func @transform_14(%arg0: i32) -> (i32, i32) {
    %c0_i32 = arith.constant 0 : i32
    %c0_i32_0 = arith.constant 0 : i32
    %c0_i32_1 = arith.constant 0 : i32
    return %c0_i32, %c0_i32_0 : i32, i32
  }
  func.func @transform_15(%arg0: i32) -> (i32, i32, i32) {
    %c0_i32 = arith.constant 0 : i32
    %c0_i32_0 = arith.constant 0 : i32
    %c0_i32_1 = arith.constant 0 : i32
    return %arg0, %c0_i32, %c0_i32_0 : i32, i32, i32
  }
}

</mosaic_0001>

<llo_original>
// kernel: albert_transformer_forward.1
$region0: #{albert_transformer_forward.1}
  #allocation0 [shape = 'u32[]', space=smem, size = 0x4, offset = 0x4, fixed_abs, tag = 'smem constant byte address 0x4 - core index']
  #allocation1 [shape = 'u32[144,128]{1,0:T(1,128)}', space=vmem, size = 0x12000, scoped, tag = 'internal scratch']
  %s0 = inlined_call_operand.vmem [shape: f32[2,8,16], index: 0, kind: input, shape index: {}]
  %s1 = inlined_call_operand.hbm [shape: bf16[16,32], index: 1, kind: input, shape index: {}]
  %s2 = inlined_call_operand.vmem [shape: f32[1,32], index: 2, kind: input, shape index: {}]
  %s3 = inlined_call_operand.vmem [shape: bf16[32,96], index: 3, kind: input, shape index: {}]
  %s4 = inlined_call_operand.vmem [shape: f32[1,96], index: 4, kind: input, shape index: {}]
  %s5 = inlined_call_operand.vmem [shape: bf16[4,8,32], index: 5, kind: input, shape index: {}]
  %s6 = inlined_call_operand.hbm [shape: f32[1,32], index: 6, kind: input, shape index: {}]
  %s7 = inlined_call_operand.hbm [shape: f32[1,32], index: 7, kind: input, shape index: {}]
  %s8 = inlined_call_operand.hbm [shape: f32[1,32], index: 8, kind: input, shape index: {}]
  %s9 = inlined_call_operand.vmem [shape: bf16[32,64], index: 9, kind: input, shape index: {}]
  %s10 = inlined_call_operand.hbm [shape: f32[1,64], index: 10, kind: input, shape index: {}]
  %s11 = inlined_call_operand.vmem [shape: bf16[64,32], index: 11, kind: input, shape index: {}]
  %s12 = inlined_call_operand.hbm [shape: f32[1,32], index: 12, kind: input, shape index: {}]
  %s13 = inlined_call_operand.vmem [shape: f32[1,32], index: 13, kind: input, shape index: {}]
  %s14 = inlined_call_operand.hbm [shape: f32[1,32], index: 14, kind: input, shape index: {}]
  %s15 = inlined_call_operand.hbm [shape: f32[2,8,32], index: 15, kind: output, shape index: {}]
  %s16 = sld [smem:[#allocation0]]
  $region121: #{albert_transformer_forward.1} parent=0
    _
  %s18 = ssub.s32 1, %s16
  %s19 = scalar_select 0, %s18, %s16
  $region1: #{albert_transformer_forward.1} parent=0
    #allocation2 [shape = 'u8[4096]{0}', space=vmem, size = 0x1000, scoped, tag = 'input window, operand 1, single buffered']
    #allocation3 [shape = 's32[2]{0}', space=sflag, size = 0x8, scoped, tag = 'scoped memory for albert_transformer_forward.1']
    #allocation4 [shape = 's32[2]{0}', space=sflag, size = 0x8, scoped, tag = 'scoped memory for albert_transformer_forward.1']
    #allocation5 [shape = 'u8[512]{0}', space=vmem, size = 0x400, scoped, tag = 'input window, operand 6, single buffered']
    #allocation6 [shape = 's32[1]{0}', space=sflag, size = 0x4, scoped, tag = 'scoped memory for albert_transformer_forward.1']
    #allocation7 [shape = 'u8[512]{0}', space=vmem, size = 0x400, scoped, tag = 'input window, operand 7, single buffered']
    #allocation8 [shape = 'u8[512]{0}', space=vmem, size = 0x400, scoped, tag = 'input window, operand 8, single buffered']
    #allocation9 [shape = 's32[1]{0}', space=sflag, size = 0x4, scoped, tag = 'scoped memory for albert_transformer_forward.1']
    #allocation10 [shape = 'u8[512]{0}', space=vmem, size = 0x400, scoped, tag = 'input window, operand 10, single buffered']
    #allocation11 [shape = 'u8[512]{0}', space=vmem, size = 0x400, scoped, tag = 'input window, operand 12, single buffered']
    #allocation12 [shape = 's32[1]{0}', space=sflag, size = 0x4, scoped, tag = 'scoped memory for albert_transformer_forward.1']
    #allocation13 [shape = 'u8[512]{0}', space=vmem, size = 0x400, scoped, tag = 'input window, operand 14, single buffered']
    #allocation14 [shape = 'u8[8192]{0}', space=vmem, size = 0x2000, scoped, tag = 'output window, operand 0']
    %20 = vsyncpa [#allocation3], 0
    %21 = vsyncpa [#allocation6], 0
    %22 = vsyncpa [#allocation9], 0
    %23 = vsyncpa [#allocation12], 0
    %24 = vsyncpa [#allocation4], 0
    %s25 = scalar_lea.sflag [#allocation4], 1
    %26 = vsyncpa %s25, 0
    loop: start=0, step=1, limit=4
    $region2: #{albert_transformer_forward.1} parent=1 // loop_pre_header
      _
    $region3: #{albert_transformer_forward.1} parent=1 // loop_header
      %s28 = sphi 0, %s32
      %p29 = scmp.ge.s32.totalorder %s28, 4
      %s38 = sphi 0, %s40
      %s41 = sphi 0, %s38
      %s42 = sphi 0, %s41
      %s58 = sphi 0, %s42
      %s62 = sphi 0, %s62
      %s64 = sphi 0, %s62
      %s65 = sphi 0, %s64
      %s79 = sphi 0, %s65
      %s83 = sphi 0, %s83
      %s85 = sphi 0, %s83
      %s86 = sphi 0, %s85
      %s100 = sphi 0, %s86
      %s104 = sphi 0, %s104
      %s106 = sphi 0, %s104
      %s107 = sphi 0, %s106
      %s121 = sphi 0, %s107
      %s125 = sphi 0, %s125
      %s127 = sphi 0, %s125
      %s128 = sphi 0, %s127
      %s142 = sphi 0, %s128
      %s146 = sphi 0, %s146
      %s148 = sphi 0, %s146
      %s149 = sphi 0, %s148
      %s163 = sphi 0, %s149
      %s167 = sphi 0, %s167
      %s169 = sphi 0, %s167
      %s170 = sphi 0, %s169
      %s184 = sphi 0, %s170
      %s188 = sphi 0, %s188
      %s190 = sphi 0, %s188
      %s191 = sphi 0, %s190
      %s205 = sphi 0, %s191
      %s209 = sphi 0, %s209
      %s211 = sphi 0, %s209
      %s212 = sphi 0, %s211
      %s226 = sphi 0, %s212
      %s230 = sphi 0, %s230
      %s232 = sphi 0, %s230
      %s233 = sphi 0, %s232
      %s247 = sphi 0, %s233
      %s251 = sphi 0, %s251
      %s253 = sphi 0, %s251
      %s254 = sphi 0, %s253
      %s268 = sphi 0, %s254
      %s272 = sphi 0, %s272
      %s274 = sphi 0, %s272
      %s275 = sphi 0, %s274
      %s289 = sphi 0, %s275
      %s293 = sphi 0, %s293
      %s295 = sphi 0, %s293
      %s296 = sphi 0, %s295
      %s310 = sphi 0, %s296
      %s314 = sphi 0, %s314
      %s316 = sphi 0, %s314
      %s317 = sphi 0, %s316
      %s331 = sphi 0, %s317
      %s335 = sphi 0, %s335
      %s337 = sphi 0, %s335
      %s338 = sphi 0, %s337
      %s352 = sphi 0, %s338
      %s358 = sphi 0, %s360
      %s361 = sphi 0, %s358
      %s362 = sphi 0, %s361
      %s378 = sphi 0, %s362
    $region4: #{albert_transformer_forward.1} parent=1 // loop_header_branch
      %31 = sbr.rel (%p29) target = $region8
    $region5: #{albert_transformer_forward.1} parent=1 // loop_body
      %s33 = ssub.s32 %s28, 1
      %s34 = ssub.s32 %s28, 2
      %s35 = sadd.s32 %s28, 1
      %s36 = ssub.s32 %s28, %s35
      %p37 = scmp.eq.s32.totalorder %s36, 0
      %s39 = sadd.s32 %s38, 1
      %s40 = scalar_select %p37, %s38, %s39
      %p43 = pneg %p37
      %p44 = scmp.eq.s32.totalorder %s28, 1
      %p45 = por %p43, %p44
      %p46 = scmp.ne.s32.totalorder %s38, %s41
      %p47 = scmp.eq.s32.totalorder %s28, 0
      %p48 = por %p46, %p47
      %p49 = scmp.ne.s32.totalorder %s38, %s41
      %p50 = scmp.eq.s32.totalorder %s33, 1
      %p51 = por %p49, %p50
      %p52 = scmp.ne.s32.totalorder %s41, %s42
      %p53 = scmp.eq.s32.totalorder %s33, 0
      %p54 = por %p52, %p53
      %p55 = scmp.ne.s32.totalorder %s41, %s42
      %p56 = scmp.eq.s32.totalorder %s34, 1
      %p57 = por %p55, %p56
      %p59 = scmp.ne.s32.totalorder %s42, %s58
      %p60 = scmp.eq.s32.totalorder %s34, 0
      %p61 = por %p59, %p60
      %s63 = sadd.s32 %s62, 1
      %p66 = scmp.eq.s32.totalorder %s28, 1
      %p67 = scmp.ne.s32.totalorder %s62, %s64
      %p68 = scmp.eq.s32.totalorder %s28, 0
      %p69 = por %p67, %p68
      %p70 = scmp.ne.s32.totalorder %s62, %s64
      %p71 = scmp.eq.s32.totalorder %s33, 1
      %p72 = por %p70, %p71
      %p73 = scmp.ne.s32.totalorder %s64, %s65
      %p74 = scmp.eq.s32.totalorder %s33, 0
      %p75 = por %p73, %p74
      %p76 = scmp.ne.s32.totalorder %s64, %s65
      %p77 = scmp.eq.s32.totalorder %s34, 1
      %p78 = por %p76, %p77
      %p80 = scmp.ne.s32.totalorder %s65, %s79
      %p81 = scmp.eq.s32.totalorder %s34, 0
      %p82 = por %p80, %p81
      %s84 = sadd.s32 %s83, 1
      %p87 = scmp.eq.s32.totalorder %s28, 1
      %p88 = scmp.ne.s32.totalorder %s83, %s85
      %p89 = scmp.eq.s32.totalorder %s28, 0
      %p90 = por %p88, %p89
      %p91 = scmp.ne.s32.totalorder %s83, %s85
      %p92 = scmp.eq.s32.totalorder %s33, 1
      %p93 = por %p91, %p92
      %p94 = scmp.ne.s32.totalorder %s85, %s86
      %p95 = scmp.eq.s32.totalorder %s33, 0
      %p96 = por %p94, %p95
      %p97 = scmp.ne.s32.totalorder %s85, %s86
      %p98 = scmp.eq.s32.totalorder %s34, 1
      %p99 = por %p97, %p98
      %p101 = scmp.ne.s32.totalorder %s86, %s100
      %p102 = scmp.eq.s32.totalorder %s34, 0
      %p103 = por %p101, %p102
      %s105 = sadd.s32 %s104, 1
      %p108 = scmp.eq.s32.totalorder %s28, 1
      %p109 = scmp.ne.s32.totalorder %s104, %s106
      %p110 = scmp.eq.s32.totalorder %s28, 0
      %p111 = por %p109, %p110
      %p112 = scmp.ne.s32.totalorder %s104, %s106
      %p113 = scmp.eq.s32.totalorder %s33, 1
      %p114 = por %p112, %p113
      %p115 = scmp.ne.s32.totalorder %s106, %s107
      %p116 = scmp.eq.s32.totalorder %s33, 0
      %p117 = por %p115, %p116
      %p118 = scmp.ne.s32.totalorder %s106, %s107
      %p119 = scmp.eq.s32.totalorder %s34, 1
      %p120 = por %p118, %p119
      %p122 = scmp.ne.s32.totalorder %s107, %s121
      %p123 = scmp.eq.s32.totalorder %s34, 0
      %p124 = por %p122, %p123
      %s126 = sadd.s32 %s125, 1
      %p129 = scmp.eq.s32.totalorder %s28, 1
      %p130 = scmp.ne.s32.totalorder %s125, %s127
      %p131 = scmp.eq.s32.totalorder %s28, 0
      %p132 = por %p130, %p131
      %p133 = scmp.ne.s32.totalorder %s125, %s127
      %p134 = scmp.eq.s32.totalorder %s33, 1
      %p135 = por %p133, %p134
      %p136 = scmp.ne.s32.totalorder %s127, %s128
      %p137 = scmp.eq.s32.totalorder %s33, 0
      %p138 = por %p136, %p137
      %p139 = scmp.ne.s32.totalorder %s127, %s128
      %p140 = scmp.eq.s32.totalorder %s34, 1
      %p141 = por %p139, %p140
      %p143 = scmp.ne.s32.totalorder %s128, %s142
      %p144 = scmp.eq.s32.totalorder %s34, 0
      %p145 = por %p143, %p144
      %s147 = sadd.s32 %s146, 1
      %p150 = scmp.eq.s32.totalorder %s28, 1
      %p151 = scmp.ne.s32.totalorder %s146, %s148
      %p152 = scmp.eq.s32.totalorder %s28, 0
      %p153 = por %p151, %p152
      %p154 = scmp.ne.s32.totalorder %s146, %s148
      %p155 = scmp.eq.s32.totalorder %s33, 1
      %p156 = por %p154, %p155
      %p157 = scmp.ne.s32.totalorder %s148, %s149
      %p158 = scmp.eq.s32.totalorder %s33, 0
      %p159 = por %p157, %p158
      %p160 = scmp.ne.s32.totalorder %s148, %s149
      %p161 = scmp.eq.s32.totalorder %s34, 1
      %p162 = por %p160, %p161
      %p164 = scmp.ne.s32.totalorder %s149, %s163
      %p165 = scmp.eq.s32.totalorder %s34, 0
      %p166 = por %p164, %p165
      %s168 = sadd.s32 %s167, 1
      %p171 = scmp.eq.s32.totalorder %s28, 1
      %p172 = scmp.ne.s32.totalorder %s167, %s169
      %p173 = scmp.eq.s32.totalorder %s28, 0
      %p174 = por %p172, %p173
      %p175 = scmp.ne.s32.totalorder %s167, %s169
      %p176 = scmp.eq.s32.totalorder %s33, 1
      %p177 = por %p175, %p176
      %p178 = scmp.ne.s32.totalorder %s169, %s170
      %p179 = scmp.eq.s32.totalorder %s33, 0
      %p180 = por %p178, %p179
      %p181 = scmp.ne.s32.totalorder %s169, %s170
      %p182 = scmp.eq.s32.totalorder %s34, 1
      %p183 = por %p181, %p182
      %p185 = scmp.ne.s32.totalorder %s170, %s184
      %p186 = scmp.eq.s32.totalorder %s34, 0
      %p187 = por %p185, %p186
      %s189 = sadd.s32 %s188, 1
      %p192 = scmp.eq.s32.totalorder %s28, 1
      %p193 = scmp.ne.s32.totalorder %s188, %s190
      %p194 = scmp.eq.s32.totalorder %s28, 0
      %p195 = por %p193, %p194
      %p196 = scmp.ne.s32.totalorder %s188, %s190
      %p197 = scmp.eq.s32.totalorder %s33, 1
      %p198 = por %p196, %p197
      %p199 = scmp.ne.s32.totalorder %s190, %s191
      %p200 = scmp.eq.s32.totalorder %s33, 0
      %p201 = por %p199, %p200
      %p202 = scmp.ne.s32.totalorder %s190, %s191
      %p203 = scmp.eq.s32.totalorder %s34, 1
      %p204 = por %p202, %p203
      %p206 = scmp.ne.s32.totalorder %s191, %s205
      %p207 = scmp.eq.s32.totalorder %s34, 0
      %p208 = por %p206, %p207
      %s210 = sadd.s32 %s209, 1
      %p213 = scmp.eq.s32.totalorder %s28, 1
      %p214 = scmp.ne.s32.totalorder %s209, %s211
      %p215 = scmp.eq.s32.totalorder %s28, 0
      %p216 = por %p214, %p215
      %p217 = scmp.ne.s32.totalorder %s209, %s211
      %p218 = scmp.eq.s32.totalorder %s33, 1
      %p219 = por %p217, %p218
      %p220 = scmp.ne.s32.totalorder %s211, %s212
      %p221 = scmp.eq.s32.totalorder %s33, 0
      %p222 = por %p220, %p221
      %p223 = scmp.ne.s32.totalorder %s211, %s212
      %p224 = scmp.eq.s32.totalorder %s34, 1
      %p225 = por %p223, %p224
      %p227 = scmp.ne.s32.totalorder %s212, %s226
      %p228 = scmp.eq.s32.totalorder %s34, 0
      %p229 = por %p227, %p228
      %s231 = sadd.s32 %s230, 1
      %p234 = scmp.eq.s32.totalorder %s28, 1
      %p235 = scmp.ne.s32.totalorder %s230, %s232
      %p236 = scmp.eq.s32.totalorder %s28, 0
      %p237 = por %p235, %p236
      %p238 = scmp.ne.s32.totalorder %s230, %s232
      %p239 = scmp.eq.s32.totalorder %s33, 1
      %p240 = por %p238, %p239
      %p241 = scmp.ne.s32.totalorder %s232, %s233
      %p242 = scmp.eq.s32.totalorder %s33, 0
      %p243 = por %p241, %p242
      %p244 = scmp.ne.s32.totalorder %s232, %s233
      %p245 = scmp.eq.s32.totalorder %s34, 1
      %p246 = por %p244, %p245
      %p248 = scmp.ne.s32.totalorder %s233, %s247
      %p249 = scmp.eq.s32.totalorder %s34, 0
      %p250 = por %p248, %p249
      %s252 = sadd.s32 %s251, 1
      %p255 = scmp.eq.s32.totalorder %s28, 1
      %p256 = scmp.ne.s32.totalorder %s251, %s253
      %p257 = scmp.eq.s32.totalorder %s28, 0
      %p258 = por %p256, %p257
      %p259 = scmp.ne.s32.totalorder %s251, %s253
      %p260 = scmp.eq.s32.totalorder %s33, 1
      %p261 = por %p259, %p260
      %p262 = scmp.ne.s32.totalorder %s253, %s254
      %p263 = scmp.eq.s32.totalorder %s33, 0
      %p264 = por %p262, %p263
      %p265 = scmp.ne.s32.totalorder %s253, %s254
      %p266 = scmp.eq.s32.totalorder %s34, 1
      %p267 = por %p265, %p266
      %p269 = scmp.ne.s32.totalorder %s254, %s268
      %p270 = scmp.eq.s32.totalorder %s34, 0
      %p271 = por %p269, %p270
      %s273 = sadd.s32 %s272, 1
      %p276 = scmp.eq.s32.totalorder %s28, 1
      %p277 = scmp.ne.s32.totalorder %s272, %s274
      %p278 = scmp.eq.s32.totalorder %s28, 0
      %p279 = por %p277, %p278
      %p280 = scmp.ne.s32.totalorder %s272, %s274
      %p281 = scmp.eq.s32.totalorder %s33, 1
      %p282 = por %p280, %p281
      %p283 = scmp.ne.s32.totalorder %s274, %s275
      %p284 = scmp.eq.s32.totalorder %s33, 0
      %p285 = por %p283, %p284
      %p286 = scmp.ne.s32.totalorder %s274, %s275
      %p287 = scmp.eq.s32.totalorder %s34, 1
      %p288 = por %p286, %p287
      %p290 = scmp.ne.s32.totalorder %s275, %s289
      %p291 = scmp.eq.s32.totalorder %s34, 0
      %p292 = por %p290, %p291
      %s294 = sadd.s32 %s293, 1
      %p297 = scmp.eq.s32.totalorder %s28, 1
      %p298 = scmp.ne.s32.totalorder %s293, %s295
      %p299 = scmp.eq.s32.totalorder %s28, 0
      %p300 = por %p298, %p299
      %p301 = scmp.ne.s32.totalorder %s293, %s295
      %p302 = scmp.eq.s32.totalorder %s33, 1
      %p303 = por %p301, %p302
      %p304 = scmp.ne.s32.totalorder %s295, %s296
      %p305 = scmp.eq.s32.totalorder %s33, 0
      %p306 = por %p304, %p305
      %p307 = scmp.ne.s32.totalorder %s295, %s296
      %p308 = scmp.eq.s32.totalorder %s34, 1
      %p309 = por %p307, %p308
      %p311 = scmp.ne.s32.totalorder %s296, %s310
      %p312 = scmp.eq.s32.totalorder %s34, 0
      %p313 = por %p311, %p312
      %s315 = sadd.s32 %s314, 1
      %p318 = scmp.eq.s32.totalorder %s28, 1
      %p319 = scmp.ne.s32.totalorder %s314, %s316
      %p320 = scmp.eq.s32.totalorder %s28, 0
      %p321 = por %p319, %p320
      %p322 = scmp.ne.s32.totalorder %s314, %s316
      %p323 = scmp.eq.s32.totalorder %s33, 1
      %p324 = por %p322, %p323
      %p325 = scmp.ne.s32.totalorder %s316, %s317
      %p326 = scmp.eq.s32.totalorder %s33, 0
      %p327 = por %p325, %p326
      %p328 = scmp.ne.s32.totalorder %s316, %s317
      %p329 = scmp.eq.s32.totalorder %s34, 1
      %p330 = por %p328, %p329
      %p332 = scmp.ne.s32.totalorder %s317, %s331
      %p333 = scmp.eq.s32.totalorder %s34, 0
      %p334 = por %p332, %p333
      %s336 = sadd.s32 %s335, 1
      %p339 = scmp.eq.s32.totalorder %s28, 1
      %p340 = scmp.ne.s32.totalorder %s335, %s337
      %p341 = scmp.eq.s32.totalorder %s28, 0
      %p342 = por %p340, %p341
      %p343 = scmp.ne.s32.totalorder %s335, %s337
      %p344 = scmp.eq.s32.totalorder %s33, 1
      %p345 = por %p343, %p344
      %p346 = scmp.ne.s32.totalorder %s337, %s338
      %p347 = scmp.eq.s32.totalorder %s33, 0
      %p348 = por %p346, %p347
      %p349 = scmp.ne.s32.totalorder %s337, %s338
      %p350 = scmp.eq.s32.totalorder %s34, 1
      %p351 = por %p349, %p350
      %p353 = scmp.ne.s32.totalorder %s338, %s352
      %p354 = scmp.eq.s32.totalorder %s34, 0
      %p355 = por %p353, %p354
      %s356 = ssub.s32 %s28, %s35
      %p357 = scmp.eq.s32.totalorder %s356, 0
      %s359 = sadd.s32 %s358, 1
      %s360 = scalar_select %p357, %s358, %s359
      %p363 = pneg %p357
      %p364 = scmp.eq.s32.totalorder %s28, 1
      %p365 = por %p363, %p364
      %p366 = scmp.ne.s32.totalorder %s358, %s361
      %p367 = scmp.eq.s32.totalorder %s28, 0
      %p368 = por %p366, %p367
      %p369 = scmp.ne.s32.totalorder %s358, %s361
      %p370 = scmp.eq.s32.totalorder %s33, 1
      %p371 = por %p369, %p370
      %p372 = scmp.ne.s32.totalorder %s361, %s362
      %p373 = scmp.eq.s32.totalorder %s33, 0
      %p374 = por %p372, %p373
      %p375 = scmp.ne.s32.totalorder %s361, %s362
      %p376 = scmp.eq.s32.totalorder %s34, 1
      %p377 = por %p375, %p376
      %p379 = scmp.ne.s32.totalorder %s362, %s378
      %p380 = scmp.eq.s32.totalorder %s34, 0
      %p381 = por %p379, %p380
      %p382 = scmp.le.s32.totalorder 1, %s28
      %p383 = scmp.lt.s32.totalorder %s28, 3
      %p384 = pnand %p382, %p383
      %p385 = pneg %p384
      // Predicated region
      $region9: #{albert_transformer_forward.1} parent=5 // pred_check
        _
      $region10: #{albert_transformer_forward.1} parent=5 // pred_check_branch
        %387 = sbr.rel (%p384) target = $region12
      $region11: #{albert_transformer_forward.1} parent=5 // pred_region
        %s388 = ssub.s32 %s28, 1
        // Predicated region
        $region13: #{albert_transformer_forward.1} parent=11 // pred_check
          %p389 = pneg %p75
        $region14: #{albert_transformer_forward.1} parent=11 // pred_check_branch
          %391 = sbr.rel (%p389) target = $region16
        $region15: #{albert_transformer_forward.1} parent=11 // pred_region
          %s393 = ssub.s32 128, 128
          %394 = vsyncadd [#allocation3], %s393
          %s395 = sshll.u32 [#allocation2], 4
          %s396 = int_to_ptr.vmem [resolvable:$true] %s395
          %401 = dma.hbm_to_vmem [thread:$0]  %s1, 128, %s396, [#allocation3], 64, 64, 4
        $region16: #{albert_transformer_forward.1} parent=11 // pred_fallthru
          _
        // Predicated region
        $region17: #{albert_transformer_forward.1} parent=11 // pred_check
          %p402 = pneg %p96
        $region18: #{albert_transformer_forward.1} parent=11 // pred_check_branch
          %404 = sbr.rel (%p402) target = $region20
        $region19: #{albert_transformer_forward.1} parent=11 // pred_region
          _
        $region20: #{albert_transformer_forward.1} parent=11 // pred_fallthru
          _
        // Predicated region
        $region21: #{albert_transformer_forward.1} parent=11 // pred_check
          %p405 = pneg %p117
        $region22: #{albert_transformer_forward.1} parent=11 // pred_check_branch
          %407 = sbr.rel (%p405) target = $region24
        $region23: #{albert_transformer_forward.1} parent=11 // pred_region
          _
        $region24: #{albert_transformer_forward.1} parent=11 // pred_fallthru
          _
        // Predicated region
        $region25: #{albert_transformer_forward.1} parent=11 // pred_check
          %p408 = pneg %p138
        $region26: #{albert_transformer_forward.1} parent=11 // pred_check_branch
          %410 = sbr.rel (%p408) target = $region28
        $region27: #{albert_transformer_forward.1} parent=11 // pred_region
          _
        $region28: #{albert_transformer_forward.1} parent=11 // pred_fallthru
          _
        // Predicated region
        $region29: #{albert_transformer_forward.1} parent=11 // pred_check
          %p411 = pneg %p159
        $region30: #{albert_transformer_forward.1} parent=11 // pred_check_branch
          %413 = sbr.rel (%p411) target = $region32
        $region31: #{albert_transformer_forward.1} parent=11 // pred_region
          _
        $region32: #{albert_transformer_forward.1} parent=11 // pred_fallthru
          _
        // Predicated region
        $region33: #{albert_transformer_forward.1} parent=11 // pred_check
          %p414 = pneg %p180
        $region34: #{albert_transformer_forward.1} parent=11 // pred_check_branch
          %416 = sbr.rel (%p414) target = $region36
        $region35: #{albert_transformer_forward.1} parent=11 // pred_region
          %s418 = ssub.s32 16, 16
          %419 = vsyncadd [#allocation6], %s418
          %s421 = sshll.u32 [#allocation5], 4
          %s422 = int_to_ptr.vmem [resolvable:$true] %s421
          %424 = dma.hbm_to_vmem [thread:$0]  %s6, 16, %s422, [#allocation6]
        $region36: #{albert_transformer_forward.1} parent=11 // pred_fallthru
          _
        // Predicated region
        $region37: #{albert_transformer_forward.1} parent=11 // pred_check
          %p425 = pneg %p201
        $region38: #{albert_transformer_forward.1} parent=11 // pred_check_branch
          %427 = sbr.rel (%p425) target = $region40
        $region39: #{albert_transformer_forward.1} parent=11 // pred_region
          %s429 = ssub.s32 16, 16
          %430 = vsyncadd [#allocation6], %s429
          %s432 = sshll.u32 [#allocation7], 4
          %s433 = int_to_ptr.vmem [resolvable:$true] %s432
          %435 = dma.hbm_to_vmem [thread:$0]  %s7, 16, %s433, [#allocation6]
        $region40: #{albert_transformer_forward.1} parent=11 // pred_fallthru
          _
        // Predicated region
        $region41: #{albert_transformer_forward.1} parent=11 // pred_check
          %p436 = pneg %p222
        $region42: #{albert_transformer_forward.1} parent=11 // pred_check_branch
          %438 = sbr.rel (%p436) target = $region44
        $region43: #{albert_transformer_forward.1} parent=11 // pred_region
          %s440 = ssub.s32 16, 16
          %441 = vsyncadd [#allocation9], %s440
          %s443 = sshll.u32 [#allocation8], 4
          %s444 = int_to_ptr.vmem [resolvable:$true] %s443
          %446 = dma.hbm_to_vmem [thread:$0]  %s8, 16, %s444, [#allocation9]
        $region44: #{albert_transformer_forward.1} parent=11 // pred_fallthru
          _
        // Predicated region
        $region45: #{albert_transformer_forward.1} parent=11 // pred_check
          %p447 = pneg %p243
        $region46: #{albert_transformer_forward.1} parent=11 // pred_check_branch
          %449 = sbr.rel (%p447) target = $region48
        $region47: #{albert_transformer_forward.1} parent=11 // pred_region
          _
        $region48: #{albert_transformer_forward.1} parent=11 // pred_fallthru
          _
        // Predicated region
        $region49: #{albert_transformer_forward.1} parent=11 // pred_check
          %p450 = pneg %p264
        $region50: #{albert_transformer_forward.1} parent=11 // pred_check_branch
          %452 = sbr.rel (%p450) target = $region52
        $region51: #{albert_transformer_forward.1} parent=11 // pred_region
          %s454 = ssub.s32 16, 16
          %455 = vsyncadd [#allocation9], %s454
          %s457 = sshll.u32 [#allocation10], 4
          %s458 = int_to_ptr.vmem [resolvable:$true] %s457
          %460 = dma.hbm_to_vmem [thread:$0]  %s10, 16, %s458, [#allocation9]
        $region52: #{albert_transformer_forward.1} parent=11 // pred_fallthru
          _
        // Predicated region
        $region53: #{albert_transformer_forward.1} parent=11 // pred_check
          %p461 = pneg %p285
        $region54: #{albert_transformer_forward.1} parent=11 // pred_check_branch
          %463 = sbr.rel (%p461) target = $region56
        $region55: #{albert_transformer_forward.1} parent=11 // pred_region
          _
        $region56: #{albert_transformer_forward.1} parent=11 // pred_fallthru
          _
        // Predicated region
        $region57: #{albert_transformer_forward.1} parent=11 // pred_check
          %p464 = pneg %p306
        $region58: #{albert_transformer_forward.1} parent=11 // pred_check_branch
          %466 = sbr.rel (%p464) target = $region60
        $region59: #{albert_transformer_forward.1} parent=11 // pred_region
          %s468 = ssub.s32 16, 16
          %469 = vsyncadd [#allocation12], %s468
          %s471 = sshll.u32 [#allocation11], 4
          %s472 = int_to_ptr.vmem [resolvable:$true] %s471
          %474 = dma.hbm_to_vmem [thread:$0]  %s12, 16, %s472, [#allocation12]
        $region60: #{albert_transformer_forward.1} parent=11 // pred_fallthru
          _
        // Predicated region
        $region61: #{albert_transformer_forward.1} parent=11 // pred_check
          %p475 = pneg %p327
        $region62: #{albert_transformer_forward.1} parent=11 // pred_check_branch
          %477 = sbr.rel (%p475) target = $region64
        $region63: #{albert_transformer_forward.1} parent=11 // pred_region
          _
        $region64: #{albert_transformer_forward.1} parent=11 // pred_fallthru
          _
        // Predicated region
        $region65: #{albert_transformer_forward.1} parent=11 // pred_check
          %p478 = pneg %p348
        $region66: #{albert_transformer_forward.1} parent=11 // pred_check_branch
          %480 = sbr.rel (%p478) target = $region68
        $region67: #{albert_transformer_forward.1} parent=11 // pred_region
          %s482 = ssub.s32 16, 16
          %483 = vsyncadd [#allocation12], %s482
          %s485 = sshll.u32 [#allocation13], 4
          %s486 = int_to_ptr.vmem [resolvable:$true] %s485
          %488 = dma.hbm_to_vmem [thread:$0]  %s14, 16, %s486, [#allocation12]
        $region68: #{albert_transformer_forward.1} parent=11 // pred_fallthru
          _
      $region12: #{albert_transformer_forward.1} parent=5 // pred_fallthru
        _
      %p489 = scmp.lt.s32.totalorder %s28, 2
      // Predicated region
      $region69: #{albert_transformer_forward.1} parent=5 // pred_check
        %p490 = pneg %p489
      $region70: #{albert_transformer_forward.1} parent=5 // pred_check_branch
        %492 = sbr.rel (%p490) target = $region72
      $region71: #{albert_transformer_forward.1} parent=5 // pred_region
        // Predicated region
        $region73: #{albert_transformer_forward.1} parent=71 // pred_check
          %p493 = pneg %p48
        $region74: #{albert_transformer_forward.1} parent=71 // pred_check_branch
          %495 = sbr.rel (%p493) target = $region76
        $region75: #{albert_transformer_forward.1} parent=71 // pred_region
          %p496 = scmp.lt.s32.totalorder %s28, 1
          %s497 = scalar_select %p496, %s28, 1
          %s498 = smul.addr %s497, 8
          %s499 = scalar_lea.vmem %s0, %s498
        $region76: #{albert_transformer_forward.1} parent=71 // pred_fallthru
          _
      $region72: #{albert_transformer_forward.1} parent=5 // pred_fallthru
        _
      %p500 = scmp.le.s32.totalorder 1, %s28
      %p501 = scmp.lt.s32.totalorder %s28, 3
      %p502 = pnand %p500, %p501
      %p503 = pneg %p502
      // Predicated region
      $region77: #{albert_transformer_forward.1} parent=5 // pred_check
        _
      $region78: #{albert_transformer_forward.1} parent=5 // pred_check_branch
        %505 = sbr.rel (%p502) target = $region80
      $region79: #{albert_transformer_forward.1} parent=5 // pred_region
        %s506 = ssub.s32 %s28, 1
        // Predicated region
        $region81: #{albert_transformer_forward.1} parent=79 // pred_check
          %p507 = pneg %p75
        $region82: #{albert_transformer_forward.1} parent=79 // pred_check_branch
          %509 = sbr.rel (%p507) target = $region84
        $region83: #{albert_transformer_forward.1} parent=79 // pred_region
          %510 = dma.done [#allocation3], 128
        $region84: #{albert_transformer_forward.1} parent=79 // pred_fallthru
          _
        // Predicated region
        $region85: #{albert_transformer_forward.1} parent=79 // pred_check
          %p511 = pneg %p180
        $region86: #{albert_transformer_forward.1} parent=79 // pred_check_branch
          %513 = sbr.rel (%p511) target = $region88
        $region87: #{albert_transformer_forward.1} parent=79 // pred_region
          %514 = dma.done [#allocation6], 16
        $region88: #{albert_transformer_forward.1} parent=79 // pred_fallthru
          _
        // Predicated region
        $region89: #{albert_transformer_forward.1} parent=79 // pred_check
          %p515 = pneg %p201
        $region90: #{albert_transformer_forward.1} parent=79 // pred_check_branch
          %517 = sbr.rel (%p515) target = $region92
        $region91: #{albert_transformer_forward.1} parent=79 // pred_region
          %518 = dma.done [#allocation6], 16
        $region92: #{albert_transformer_forward.1} parent=79 // pred_fallthru
          _
        // Predicated region
        $region93: #{albert_transformer_forward.1} parent=79 // pred_check
          %p519 = pneg %p222
        $region94: #{albert_transformer_forward.1} parent=79 // pred_check_branch
          %521 = sbr.rel (%p519) target = $region96
        $region95: #{albert_transformer_forward.1} parent=79 // pred_region
          %522 = dma.done [#allocation9], 16
        $region96: #{albert_transformer_forward.1} parent=79 // pred_fallthru
          _
        // Predicated region
        $region97: #{albert_transformer_forward.1} parent=79 // pred_check
          %p523 = pneg %p264
        $region98: #{albert_transformer_forward.1} parent=79 // pred_check_branch
          %525 = sbr.rel (%p523) target = $region100
        $region99: #{albert_transformer_forward.1} parent=79 // pred_region
          %526 = dma.done [#allocation9], 16
        $region100: #{albert_transformer_forward.1} parent=79 // pred_fallthru
          _
        // Predicated region
        $region101: #{albert_transformer_forward.1} parent=79 // pred_check
          %p527 = pneg %p306
        $region102: #{albert_transformer_forward.1} parent=79 // pred_check_branch
          %529 = sbr.rel (%p527) target = $region104
        $region103: #{albert_transformer_forward.1} parent=79 // pred_region
          %530 = dma.done [#allocation12], 16
        $region104: #{albert_transformer_forward.1} parent=79 // pred_fallthru
          _
        // Predicated region
        $region105: #{albert_transformer_forward.1} parent=79 // pred_check
          %p531 = pneg %p348
        $region106: #{albert_transformer_forward.1} parent=79 // pred_check_branch
          %533 = sbr.rel (%p531) target = $region108
        $region107: #{albert_transformer_forward.1} parent=79 // pred_region
          %534 = dma.done [#allocation12], 16
        $region108: #{albert_transformer_forward.1} parent=79 // pred_fallthru
          _
        %p535 = scmp.lt.s32.totalorder %s33, 1
        %s536 = scalar_select %p535, %s33, 1
        %s537 = smul.addr %s536, 8
        %s538 = scalar_lea.vmem %s0, %s537
        %p539 = pneg %p54
        %p540 = pneg %p51
        %p541 = pneg %p75
        %p542 = pneg %p72
        %p543 = pneg %p96
        %p544 = pneg %p93
        %p545 = pneg %p117
        %p546 = pneg %p114
        %p547 = pneg %p138
        %p548 = pneg %p135
        %p549 = pneg %p159
        %p550 = pneg %p156
        %p551 = pneg %p180
        %p552 = pneg %p177
        %p553 = pneg %p201
        %p554 = pneg %p198
        %p555 = pneg %p222
        %p556 = pneg %p219
        %p557 = pneg %p243
        %p558 = pneg %p240
        %p559 = pneg %p264
        %p560 = pneg %p261
        %p561 = pneg %p285
        %p562 = pneg %p282
        %p563 = pneg %p306
        %p564 = pneg %p303
        %p565 = pneg %p327
        %p566 = pneg %p324
        %p567 = pneg %p348
        %p568 = pneg %p345
        %p569 = pneg %p374
        %p570 = pneg %p371
        %s571 = sand.u32 %s361, 1
        %s572 = scalar_lea.sflag [#allocation4], %s571
        %s573 = sand.u32 %s361, 1
        %s574 = smul.addr %s573, 8
        %s575 = scalar_lea.vmem [#allocation14], %s574
        %p576 = scmp.lt.s32.totalorder %s33, 1
        %s577 = scalar_select %p576, %s33, 1
        %s578 = smul.addr %s577, 8
        %s579 = scalar_lea.vmem %s0, %s578
        %v581 = vld [vmem:[#allocation2] sm:$0xf]
        %v582 = vld [vmem:[#allocation2 + $0x4] sm:$0xf]
        %v583 = vld [vmem:[%s2] sm:$0x1]
        %v584 = vld [vmem:[%s3] sm:$0xf]
        %v585 = vld [vmem:[%s3 + $0x4] sm:$0xf]
        %v586 = vld [vmem:[%s3 + $0x8] sm:$0xf]
        %v587 = vld [vmem:[%s3 + $0xc] sm:$0xf]
        %v588 = vld [vmem:[%s4] sm:$0x1]
        %v589 = vld [vmem:[%s5] sm:$0xf]
        %v590 = vld [vmem:[%s5 + $0x4] sm:$0xf]
        %v591 = vld [vmem:[%s5 + $0x8] sm:$0xf]
        %v592 = vld [vmem:[%s5 + $0xc] sm:$0xf]
        %v593 = vld [vmem:[#allocation5] sm:$0x1]
        %v594 = vld [vmem:[#allocation7] sm:$0x1]
        %v595 = vld [vmem:[#allocation8] sm:$0x1]
        %v596 = vld [vmem:[%s9] sm:$0xf]
        %v597 = vld [vmem:[%s9 + $0x4] sm:$0xf]
        %v598 = vld [vmem:[%s9 + $0x8] sm:$0xf]
        %v599 = vld [vmem:[%s9 + $0xc] sm:$0xf]
        %v600 = vld [vmem:[#allocation10] sm:$0x1]
        %v601 = vld [vmem:[%s11] sm:$0xf]
        %v602 = vld [vmem:[%s11 + $0x4] sm:$0xf]
        %v603 = vld [vmem:[%s11 + $0x8] sm:$0xf]
        %v604 = vld [vmem:[%s11 + $0xc] sm:$0xf]
        %v605 = vld [vmem:[%s11 + $0x10] sm:$0xf]
        %v606 = vld [vmem:[%s11 + $0x14] sm:$0xf]
        %v607 = vld [vmem:[%s11 + $0x18] sm:$0xf]
        %v608 = vld [vmem:[%s11 + $0x1c] sm:$0xf]
        %v609 = vld [vmem:[#allocation11] sm:$0x1]
        %v610 = vld [vmem:[%s13] sm:$0x1]
        %v611 = vld [vmem:[#allocation13] sm:$0x1]
        %v612 = vld [vmem:[%s579] sm:$0xff]
        %v613 = vpack.c.bf16 %v612, %v612
        %v615 = vlaneseq
        %v616 = vshrl.u32 %v615, 7
        %v617 = vsub.s32 0, %v616
        %v618 = vrot.slane %v583, %v617
        %v622 = vunpack.c.l.b16 %v581
        %v623 = vunpack.c.l.b16 %v582
        %v624 = vpack.c.b16 %v623, %v622
        %vm626 = vcmask 130048
        %v628 = vsel %vm626, %v613, 0
        %630 = vmatprep.subr.bf16.mxu0 0
        %631 = vmatpush1.bf16.msra.mxu0 %v624
        %632 = vmatprep.subr.bf16.mxu0 0
        %633 = vmatpush1.bf16.msra.mxu0 0
        %634 = vmatprep.subr.bf16.mxu0 0
        %635 = vmatpush1.bf16.msra.mxu0 0
        %636 = vmatprep.subr.bf16.mxu0 0
        %637 = vmatpush1.bf16.msra.mxu0 0
        %638 = vmatprep.subr.bf16.mxu0 0
        %639 = vmatpush1.bf16.msra.mxu0 0
        %640 = vmatprep.subr.bf16.mxu0 0
        %641 = vmatpush1.bf16.msra.mxu0 0
        %642 = vmatprep.subr.bf16.mxu0 0
        %643 = vmatpush1.bf16.msra.mxu0 0
        %644 = vmatprep.subr.bf16.mxu0 0
        %645 = vmatpush1.bf16.msra.mxu0 0
        %646 = vmatprep.subr.bf16.mxu0 0
        %647 = vmatpush1.bf16.msra.mxu0 0
        %648 = vmatprep.subr.bf16.mxu0 0
        %649 = vmatpush1.bf16.msra.mxu0 0
        %650 = vmatprep.subr.bf16.mxu0 0
        %651 = vmatpush1.bf16.msra.mxu0 0
        %652 = vmatprep.subr.bf16.mxu0 0
        %653 = vmatpush1.bf16.msra.mxu0 0
        %654 = vmatprep.subr.bf16.mxu0 0
        %655 = vmatpush1.bf16.msra.mxu0 0
        %656 = vmatprep.subr.bf16.mxu0 0
        %657 = vmatpush1.bf16.msra.mxu0 0
        %658 = vmatprep.subr.bf16.mxu0 0
        %659 = vmatpush1.bf16.msra.mxu0 0
        %660 = vmatprep.subr.bf16.mxu0 0
        %661 = vmatpush1.bf16.msra.mxu0 0
        %662 = vmatprep.mubr.bf16.mxu0 0
        %663 = vmatmul.mubr.bf16.gmra.mrb[0].mxu0 %v628
        %v664 = vpop.f32.mrb[0].mxu0
        %v665 = vadd.f32 %v618, %v664
        %v666 = vpop.f32.mrb[0].mxu0
        %v667 = vpop.f32.mrb[0].mxu0
        %v668 = vpop.f32.mrb[0].mxu0
        %669 = vdwg.mxu0
        %v670 = vpack.c.bf16 %v665, %v665
        %v672 = vlaneseq
        %v673 = vshrl.u32 %v672, 7
        %v674 = vsub.s32 0, %v673
        %v675 = vrot.slane %v588, %v674
        %v681 = vunpack.c.l.b16 %v584
        %v682 = vunpack.c.l.b16 %v585
        %v683 = vunpack.c.l.b16 %v586
        %v684 = vunpack.c.l.b16 %v587
        %v685 = vpack.c.b16 %v682, %v681
        %v686 = vpack.c.b16 %v684, %v683
        %vm689 = vcmask 261120
        %v691 = vsel %vm689, %v670, 0
        %693 = vmatprep.subr.bf16.mxu0 0
        %694 = vmatpush1.bf16.msra.mxu0 %v685
        %695 = vmatprep.subr.bf16.mxu0 0
        %696 = vmatpush1.bf16.msra.mxu0 %v686
        %697 = vmatprep.subr.bf16.mxu0 0
        %698 = vmatpush1.bf16.msra.mxu0 0
        %699 = vmatprep.subr.bf16.mxu0 0
        %700 = vmatpush1.bf16.msra.mxu0 0
        %701 = vmatprep.subr.bf16.mxu0 0
        %702 = vmatpush1.bf16.msra.mxu0 0
        %703 = vmatprep.subr.bf16.mxu0 0
        %704 = vmatpush1.bf16.msra.mxu0 0
        %705 = vmatprep.subr.bf16.mxu0 0
        %706 = vmatpush1.bf16.msra.mxu0 0
        %707 = vmatprep.subr.bf16.mxu0 0
        %708 = vmatpush1.bf16.msra.mxu0 0
        %709 = vmatprep.subr.bf16.mxu0 0
        %710 = vmatpush1.bf16.msra.mxu0 0
        %711 = vmatprep.subr.bf16.mxu0 0
        %712 = vmatpush1.bf16.msra.mxu0 0
        %713 = vmatprep.subr.bf16.mxu0 0
        %714 = vmatpush1.bf16.msra.mxu0 0
        %715 = vmatprep.subr.bf16.mxu0 0
        %716 = vmatpush1.bf16.msra.mxu0 0
        %717 = vmatprep.subr.bf16.mxu0 0
        %718 = vmatpush1.bf16.msra.mxu0 0
        %719 = vmatprep.subr.bf16.mxu0 0
        %720 = vmatpush1.bf16.msra.mxu0 0
        %721 = vmatprep.subr.bf16.mxu0 0
        %722 = vmatpush1.bf16.msra.mxu0 0
        %723 = vmatprep.subr.bf16.mxu0 0
        %724 = vmatpush1.bf16.msra.mxu0 0
        %725 = vmatprep.mubr.bf16.mxu0 0
        %726 = vmatmul.mubr.bf16.gmra.mrb[0].mxu0 %v691
        %v727 = vpop.f32.mrb[0].mxu0
        %v728 = vadd.f32 %v675, %v727
        %v729 = vpop.f32.mrb[0].mxu0
        %v730 = vpop.f32.mrb[0].mxu0
        %v731 = vpop.f32.mrb[0].mxu0
        %732 = vdwg.mxu0
        %734 = vrot.lane.b32.xlu0 %v728, 120
        %v735 = vpop.permute.xlu0 %734
        %737 = vrot.lane.b32.xlu0 %v728, 112
        %v738 = vpop.permute.xlu0 %737
        %740 = vrot.lane.b32.xlu0 %v728, 104
        %v741 = vpop.permute.xlu0 %740
        %v743 = vpack.c.bf16 %v728, %v728
        %v744 = vpack.c.bf16 %v735, %v735
        %v745 = vpack.c.bf16 %v738, %v738
        %v746 = vpack.c.bf16 %v741, %v741
        %748 = vrot.lane.b32.xlu0 %v743, 96
        %v749 = vpop.permute.xlu0 %748
        %vm750 = vcmask 64512
        %v752 = vsel %vm750, %v743, 0
        %v755 = vsel %vm750, %v749, 0
        %757 = vmatprep.subr.bf16.mxu0 0
        %758 = vmatpush1.bf16.xpose.msra.mxu0 %v755
        %759 = vmatprep.subr.bf16.mxu0 0
        %760 = vmatpush1.bf16.xpose.msra.mxu0 0
        %761 = vmatprep.subr.bf16.mxu0 0
        %762 = vmatpush1.bf16.xpose.msra.mxu0 0
        %763 = vmatprep.subr.bf16.mxu0 0
        %764 = vmatpush1.bf16.xpose.msra.mxu0 0
        %765 = vmatprep.subr.bf16.mxu0 0
        %766 = vmatpush1.bf16.xpose.msra.mxu0 0
        %767 = vmatprep.subr.bf16.mxu0 0
        %768 = vmatpush1.bf16.xpose.msra.mxu0 0
        %769 = vmatprep.subr.bf16.mxu0 0
        %770 = vmatpush1.bf16.xpose.msra.mxu0 0
        %771 = vmatprep.subr.bf16.mxu0 0
        %772 = vmatpush1.bf16.xpose.msra.mxu0 0
        %773 = vmatprep.subr.bf16.mxu0 0
        %774 = vmatpush1.bf16.xpose.msra.mxu0 0
        %775 = vmatprep.subr.bf16.mxu0 0
        %776 = vmatpush1.bf16.xpose.msra.mxu0 0
        %777 = vmatprep.subr.bf16.mxu0 0
        %778 = vmatpush1.bf16.xpose.msra.mxu0 0
        %779 = vmatprep.subr.bf16.mxu0 0
        %780 = vmatpush1.bf16.xpose.msra.mxu0 0
        %781 = vmatprep.subr.bf16.mxu0 0
        %782 = vmatpush1.bf16.xpose.msra.mxu0 0
        %783 = vmatprep.subr.bf16.mxu0 0
        %784 = vmatpush1.bf16.xpose.msra.mxu0 0
        %785 = vmatprep.subr.bf16.mxu0 0
        %786 = vmatpush1.bf16.xpose.msra.mxu0 0
        %787 = vmatprep.subr.bf16.mxu0 0
        %788 = vmatpush1.bf16.xpose.msra.mxu0 0
        %789 = vmatprep.mubr.bf16.mxu0 0
        %790 = vmatmul.mubr.bf16.gmra.mrb[0].mxu0 %v752
        %v791 = vpop.f32.mrb[0].mxu0
        %v792 = vadd.f32 0.0, %v791
        %v793 = vpop.f32.mrb[0].mxu0
        %v794 = vpop.f32.mrb[0].mxu0
        %v795 = vpop.f32.mrb[0].mxu0
        %796 = vdwg.mxu0
        %798 = vrot.lane.b32.xlu0 %v744, 96
        %v799 = vpop.permute.xlu0 %798
        %v801 = vsel %vm750, %v744, 0
        %v804 = vsel %vm750, %v799, 0
        %806 = vmatprep.subr.bf16.mxu0 0
        %807 = vmatpush1.bf16.xpose.msra.mxu0 %v804
        %808 = vmatprep.subr.bf16.mxu0 0
        %809 = vmatpush1.bf16.xpose.msra.mxu0 0
        %810 = vmatprep.subr.bf16.mxu0 0
        %811 = vmatpush1.bf16.xpose.msra.mxu0 0
        %812 = vmatprep.subr.bf16.mxu0 0
        %813 = vmatpush1.bf16.xpose.msra.mxu0 0
        %814 = vmatprep.subr.bf16.mxu0 0
        %815 = vmatpush1.bf16.xpose.msra.mxu0 0
        %816 = vmatprep.subr.bf16.mxu0 0
        %817 = vmatpush1.bf16.xpose.msra.mxu0 0
        %818 = vmatprep.subr.bf16.mxu0 0
        %819 = vmatpush1.bf16.xpose.msra.mxu0 0
        %820 = vmatprep.subr.bf16.mxu0 0
        %821 = vmatpush1.bf16.xpose.msra.mxu0 0
        %822 = vmatprep.subr.bf16.mxu0 0
        %823 = vmatpush1.bf16.xpose.msra.mxu0 0
        %824 = vmatprep.subr.bf16.mxu0 0
        %825 = vmatpush1.bf16.xpose.msra.mxu0 0
        %826 = vmatprep.subr.bf16.mxu0 0
        %827 = vmatpush1.bf16.xpose.msra.mxu0 0
        %828 = vmatprep.subr.bf16.mxu0 0
        %829 = vmatpush1.bf16.xpose.msra.mxu0 0
        %830 = vmatprep.subr.bf16.mxu0 0
        %831 = vmatpush1.bf16.xpose.msra.mxu0 0
        %832 = vmatprep.subr.bf16.mxu0 0
        %833 = vmatpush1.bf16.xpose.msra.mxu0 0
        %834 = vmatprep.subr.bf16.mxu0 0
        %835 = vmatpush1.bf16.xpose.msra.mxu0 0
        %836 = vmatprep.subr.bf16.mxu0 0
        %837 = vmatpush1.bf16.xpose.msra.mxu0 0
        %838 = vmatprep.mubr.bf16.mxu0 0
        %839 = vmatmul.mubr.bf16.gmra.mrb[0].mxu0 %v801
        %v840 = vpop.f32.mrb[0].mxu0
        %v841 = vadd.f32 0.0, %v840
        %v842 = vpop.f32.mrb[0].mxu0
        %v843 = vpop.f32.mrb[0].mxu0
        %v844 = vpop.f32.mrb[0].mxu0
        %845 = vdwg.mxu0
        %847 = vrot.lane.b32.xlu0 %v745, 96
        %v848 = vpop.permute.xlu0 %847
        %v850 = vsel %vm750, %v745, 0
        %v853 = vsel %vm750, %v848, 0
        %855 = vmatprep.subr.bf16.mxu0 0
        %856 = vmatpush1.bf16.xpose.msra.mxu0 %v853
        %857 = vmatprep.subr.bf16.mxu0 0
        %858 = vmatpush1.bf16.xpose.msra.mxu0 0
        %859 = vmatprep.subr.bf16.mxu0 0
        %860 = vmatpush1.bf16.xpose.msra.mxu0 0
        %861 = vmatprep.subr.bf16.mxu0 0
        %862 = vmatpush1.bf16.xpose.msra.mxu0 0
        %863 = vmatprep.subr.bf16.mxu0 0
        %864 = vmatpush1.bf16.xpose.msra.mxu0 0
        %865 = vmatprep.subr.bf16.mxu0 0
        %866 = vmatpush1.bf16.xpose.msra.mxu0 0
        %867 = vmatprep.subr.bf16.mxu0 0
        %868 = vmatpush1.bf16.xpose.msra.mxu0 0
        %869 = vmatprep.subr.bf16.mxu0 0
        %870 = vmatpush1.bf16.xpose.msra.mxu0 0
        %871 = vmatprep.subr.bf16.mxu0 0
        %872 = vmatpush1.bf16.xpose.msra.mxu0 0
        %873 = vmatprep.subr.bf16.mxu0 0
        %874 = vmatpush1.bf16.xpose.msra.mxu0 0
        %875 = vmatprep.subr.bf16.mxu0 0
        %876 = vmatpush1.bf16.xpose.msra.mxu0 0
        %877 = vmatprep.subr.bf16.mxu0 0
        %878 = vmatpush1.bf16.xpose.msra.mxu0 0
        %879 = vmatprep.subr.bf16.mxu0 0
        %880 = vmatpush1.bf16.xpose.msra.mxu0 0
        %881 = vmatprep.subr.bf16.mxu0 0
        %882 = vmatpush1.bf16.xpose.msra.mxu0 0
        %883 = vmatprep.subr.bf16.mxu0 0
        %884 = vmatpush1.bf16.xpose.msra.mxu0 0
        %885 = vmatprep.subr.bf16.mxu0 0
        %886 = vmatpush1.bf16.xpose.msra.mxu0 0
        %887 = vmatprep.mubr.bf16.mxu0 0
        %888 = vmatmul.mubr.bf16.gmra.mrb[0].mxu0 %v850
        %v889 = vpop.f32.mrb[0].mxu0
        %v890 = vadd.f32 0.0, %v889
        %v891 = vpop.f32.mrb[0].mxu0
        %v892 = vpop.f32.mrb[0].mxu0
        %v893 = vpop.f32.mrb[0].mxu0
        %894 = vdwg.mxu0
        %896 = vrot.lane.b32.xlu0 %v746, 96
        %v897 = vpop.permute.xlu0 %896
        %v899 = vsel %vm750, %v746, 0
        %v902 = vsel %vm750, %v897, 0
        %904 = vmatprep.subr.bf16.mxu0 0
        %905 = vmatpush1.bf16.xpose.msra.mxu0 %v902
        %906 = vmatprep.subr.bf16.mxu0 0
        %907 = vmatpush1.bf16.xpose.msra.mxu0 0
        %908 = vmatprep.subr.bf16.mxu0 0
        %909 = vmatpush1.bf16.xpose.msra.mxu0 0
        %910 = vmatprep.subr.bf16.mxu0 0
        %911 = vmatpush1.bf16.xpose.msra.mxu0 0
        %912 = vmatprep.subr.bf16.mxu0 0
        %913 = vmatpush1.bf16.xpose.msra.mxu0 0
        %914 = vmatprep.subr.bf16.mxu0 0
        %915 = vmatpush1.bf16.xpose.msra.mxu0 0
        %916 = vmatprep.subr.bf16.mxu0 0
        %917 = vmatpush1.bf16.xpose.msra.mxu0 0
        %918 = vmatprep.subr.bf16.mxu0 0
        %919 = vmatpush1.bf16.xpose.msra.mxu0 0
        %920 = vmatprep.subr.bf16.mxu0 0
        %921 = vmatpush1.bf16.xpose.msra.mxu0 0
        %922 = vmatprep.subr.bf16.mxu0 0
        %923 = vmatpush1.bf16.xpose.msra.mxu0 0
        %924 = vmatprep.subr.bf16.mxu0 0
        %925 = vmatpush1.bf16.xpose.msra.mxu0 0
        %926 = vmatprep.subr.bf16.mxu0 0
        %927 = vmatpush1.bf16.xpose.msra.mxu0 0
        %928 = vmatprep.subr.bf16.mxu0 0
        %929 = vmatpush1.bf16.xpose.msra.mxu0 0
        %930 = vmatprep.subr.bf16.mxu0 0
        %931 = vmatpush1.bf16.xpose.msra.mxu0 0
        %932 = vmatprep.subr.bf16.mxu0 0
        %933 = vmatpush1.bf16.xpose.msra.mxu0 0
        %934 = vmatprep.subr.bf16.mxu0 0
        %935 = vmatpush1.bf16.xpose.msra.mxu0 0
        %936 = vmatprep.mubr.bf16.mxu0 0
        %937 = vmatmul.mubr.bf16.gmra.mrb[0].mxu0 %v899
        %v938 = vpop.f32.mrb[0].mxu0
        %v939 = vadd.f32 0.0, %v938
        %v940 = vpop.f32.mrb[0].mxu0
        %v941 = vpop.f32.mrb[0].mxu0
        %v942 = vpop.f32.mrb[0].mxu0
        %943 = vdwg.mxu0
        %v944 = vsel %vm750, %v792, -inf
        %945 = vmax.xlane.f32.xlu0 %v944
        %v946 = vpop.xlane.xlu0 %945
        %v947 = vsel %vm750, %v841, -inf
        %948 = vmax.xlane.f32.xlu0 %v947
        %v949 = vpop.xlane.xlu0 %948
        %v950 = vsel %vm750, %v890, -inf
        %951 = vmax.xlane.f32.xlu0 %v950
        %v952 = vpop.xlane.xlu0 %951
        %v953 = vsel %vm750, %v939, -inf
        %954 = vmax.xlane.f32.xlu0 %v953
        %v955 = vpop.xlane.xlu0 %954
        %v956 = vsub.f32 %v792, %v946
        %v957 = vsub.f32 %v841, %v949
        %v958 = vsub.f32 %v890, %v952
        %v959 = vsub.f32 %v939, %v955
        %v960 = vmul.f32 %v956, 1.442695
        %v961 = vpow.pop %v960
        %v962 = vmul.f32 %v957, 1.442695
        %v963 = vpow.pop %v962
        %v964 = vmul.f32 %v958, 1.442695
        %v965 = vpow.pop %v964
        %v966 = vmul.f32 %v959, 1.442695
        %v967 = vpow.pop %v966
        %v968 = vsel %vm750, %v961, 0.0
        %969 = vadd.xlane.f32.xlu0 %v968
        %v970 = vpop.xlane.xlu0 %969
        %v971 = vsel %vm750, %v963, 0.0
        %972 = vadd.xlane.f32.xlu0 %v971
        %v973 = vpop.xlane.xlu0 %972
        %v974 = vsel %vm750, %v965, 0.0
        %975 = vadd.xlane.f32.xlu0 %v974
        %v976 = vpop.xlane.xlu0 %975
        %v977 = vsel %vm750, %v967, 0.0
        %978 = vadd.xlane.f32.xlu0 %v977
        %v979 = vpop.xlane.xlu0 %978
        %v980 = vrcp.pop %v970
        %v981 = vrcp.pop %v973
        %v982 = vrcp.pop %v976
        %v983 = vrcp.pop %v979
        %v984 = vmul.f32 %v961, %v980
        %v985 = vmul.f32 %v963, %v981
        %v986 = vmul.f32 %v965, %v982
        %v987 = vmul.f32 %v967, %v983
        %v988 = vpack.c.bf16 %v984, %v984
        %v989 = vpack.c.bf16 %v985, %v985
        %v990 = vpack.c.bf16 %v986, %v986
        %v991 = vpack.c.bf16 %v987, %v987
        %992 = vrot.lane.b32.xlu0 %v743, 64
        %v993 = vpop.permute.xlu0 %992
        %v995 = vsel %vm750, %v988, 0
        %vm997 = vcmask 1043456
        %v999 = vsel %vm997, %v993, 0
        %1001 = vmatprep.subr.bf16.mxu0 0
        %1002 = vmatpush1.bf16.msra.mxu0 %v999
        %1003 = vmatprep.subr.bf16.mxu0 0
        %1004 = vmatpush1.bf16.msra.mxu0 0
        %1005 = vmatprep.subr.bf16.mxu0 0
        %1006 = vmatpush1.bf16.msra.mxu0 0
        %1007 = vmatprep.subr.bf16.mxu0 0
        %1008 = vmatpush1.bf16.msra.mxu0 0
        %1009 = vmatprep.subr.bf16.mxu0 0
        %1010 = vmatpush1.bf16.msra.mxu0 0
        %1011 = vmatprep.subr.bf16.mxu0 0
        %1012 = vmatpush1.bf16.msra.mxu0 0
        %1013 = vmatprep.subr.bf16.mxu0 0
        %1014 = vmatpush1.bf16.msra.mxu0 0
        %1015 = vmatprep.subr.bf16.mxu0 0
        %1016 = vmatpush1.bf16.msra.mxu0 0
        %1017 = vmatprep.subr.bf16.mxu0 0
        %1018 = vmatpush1.bf16.msra.mxu0 0
        %1019 = vmatprep.subr.bf16.mxu0 0
        %1020 = vmatpush1.bf16.msra.mxu0 0
        %1021 = vmatprep.subr.bf16.mxu0 0
        %1022 = vmatpush1.bf16.msra.mxu0 0
        %1023 = vmatprep.subr.bf16.mxu0 0
        %1024 = vmatpush1.bf16.msra.mxu0 0
        %1025 = vmatprep.subr.bf16.mxu0 0
        %1026 = vmatpush1.bf16.msra.mxu0 0
        %1027 = vmatprep.subr.bf16.mxu0 0
        %1028 = vmatpush1.bf16.msra.mxu0 0
        %1029 = vmatprep.subr.bf16.mxu0 0
        %1030 = vmatpush1.bf16.msra.mxu0 0
        %1031 = vmatprep.subr.bf16.mxu0 0
        %1032 = vmatpush1.bf16.msra.mxu0 0
        %1033 = vmatprep.mubr.bf16.mxu0 0
        %1034 = vmatmul.mubr.bf16.gmra.mrb[0].mxu0 %v995
        %v1035 = vpop.f32.mrb[0].mxu0
        %v1036 = vadd.f32 0.0, %v1035
        %v1037 = vpop.f32.mrb[0].mxu0
        %v1038 = vpop.f32.mrb[0].mxu0
        %v1039 = vpop.f32.mrb[0].mxu0
        %1040 = vdwg.mxu0
        %1041 = vrot.lane.b32.xlu0 %v744, 64
        %v1042 = vpop.permute.xlu0 %1041
        %v1044 = vsel %vm750, %v989, 0
        %v1047 = vsel %vm997, %v1042, 0
        %1049 = vmatprep.subr.bf16.mxu0 0
        %1050 = vmatpush1.bf16.msra.mxu0 %v1047
        %1051 = vmatprep.subr.bf16.mxu0 0
        %1052 = vmatpush1.bf16.msra.mxu0 0
        %1053 = vmatprep.subr.bf16.mxu0 0
        %1054 = vmatpush1.bf16.msra.mxu0 0
        %1055 = vmatprep.subr.bf16.mxu0 0
        %1056 = vmatpush1.bf16.msra.mxu0 0
        %1057 = vmatprep.subr.bf16.mxu0 0
        %1058 = vmatpush1.bf16.msra.mxu0 0
        %1059 = vmatprep.subr.bf16.mxu0 0
        %1060 = vmatpush1.bf16.msra.mxu0 0
        %1061 = vmatprep.subr.bf16.mxu0 0
        %1062 = vmatpush1.bf16.msra.mxu0 0
        %1063 = vmatprep.subr.bf16.mxu0 0
        %1064 = vmatpush1.bf16.msra.mxu0 0
        %1065 = vmatprep.subr.bf16.mxu0 0
        %1066 = vmatpush1.bf16.msra.mxu0 0
        %1067 = vmatprep.subr.bf16.mxu0 0
        %1068 = vmatpush1.bf16.msra.mxu0 0
        %1069 = vmatprep.subr.bf16.mxu0 0
        %1070 = vmatpush1.bf16.msra.mxu0 0
        %1071 = vmatprep.subr.bf16.mxu0 0
        %1072 = vmatpush1.bf16.msra.mxu0 0
        %1073 = vmatprep.subr.bf16.mxu0 0
        %1074 = vmatpush1.bf16.msra.mxu0 0
        %1075 = vmatprep.subr.bf16.mxu0 0
        %1076 = vmatpush1.bf16.msra.mxu0 0
        %1077 = vmatprep.subr.bf16.mxu0 0
        %1078 = vmatpush1.bf16.msra.mxu0 0
        %1079 = vmatprep.subr.bf16.mxu0 0
        %1080 = vmatpush1.bf16.msra.mxu0 0
        %1081 = vmatprep.mubr.bf16.mxu0 0
        %1082 = vmatmul.mubr.bf16.gmra.mrb[0].mxu0 %v1044
        %v1083 = vpop.f32.mrb[0].mxu0
        %v1084 = vadd.f32 0.0, %v1083
        %v1085 = vpop.f32.mrb[0].mxu0
        %v1086 = vpop.f32.mrb[0].mxu0
        %v1087 = vpop.f32.mrb[0].mxu0
        %1088 = vdwg.mxu0
        %1089 = vrot.lane.b32.xlu0 %v745, 64
        %v1090 = vpop.permute.xlu0 %1089
        %v1092 = vsel %vm750, %v990, 0
        %v1095 = vsel %vm997, %v1090, 0
        %1097 = vmatprep.subr.bf16.mxu0 0
        %1098 = vmatpush1.bf16.msra.mxu0 %v1095
        %1099 = vmatprep.subr.bf16.mxu0 0
        %1100 = vmatpush1.bf16.msra.mxu0 0
        %1101 = vmatprep.subr.bf16.mxu0 0
        %1102 = vmatpush1.bf16.msra.mxu0 0
        %1103 = vmatprep.subr.bf16.mxu0 0
        %1104 = vmatpush1.bf16.msra.mxu0 0
        %1105 = vmatprep.subr.bf16.mxu0 0
        %1106 = vmatpush1.bf16.msra.mxu0 0
        %1107 = vmatprep.subr.bf16.mxu0 0
        %1108 = vmatpush1.bf16.msra.mxu0 0
        %1109 = vmatprep.subr.bf16.mxu0 0
        %1110 = vmatpush1.bf16.msra.mxu0 0
        %1111 = vmatprep.subr.bf16.mxu0 0
        %1112 = vmatpush1.bf16.msra.mxu0 0
        %1113 = vmatprep.subr.bf16.mxu0 0
        %1114 = vmatpush1.bf16.msra.mxu0 0
        %1115 = vmatprep.subr.bf16.mxu0 0
        %1116 = vmatpush1.bf16.msra.mxu0 0
        %1117 = vmatprep.subr.bf16.mxu0 0
        %1118 = vmatpush1.bf16.msra.mxu0 0
        %1119 = vmatprep.subr.bf16.mxu0 0
        %1120 = vmatpush1.bf16.msra.mxu0 0
        %1121 = vmatprep.subr.bf16.mxu0 0
        %1122 = vmatpush1.bf16.msra.mxu0 0
        %1123 = vmatprep.subr.bf16.mxu0 0
        %1124 = vmatpush1.bf16.msra.mxu0 0
        %1125 = vmatprep.subr.bf16.mxu0 0
        %1126 = vmatpush1.bf16.msra.mxu0 0
        %1127 = vmatprep.subr.bf16.mxu0 0
        %1128 = vmatpush1.bf16.msra.mxu0 0
        %1129 = vmatprep.mubr.bf16.mxu0 0
        %1130 = vmatmul.mubr.bf16.gmra.mrb[0].mxu0 %v1092
        %v1131 = vpop.f32.mrb[0].mxu0
        %v1132 = vadd.f32 0.0, %v1131
        %v1133 = vpop.f32.mrb[0].mxu0
        %v1134 = vpop.f32.mrb[0].mxu0
        %v1135 = vpop.f32.mrb[0].mxu0
        %1136 = vdwg.mxu0
        %1137 = vrot.lane.b32.xlu0 %v746, 64
        %v1138 = vpop.permute.xlu0 %1137
        %v1140 = vsel %vm750, %v991, 0
        %v1143 = vsel %vm997, %v1138, 0
        %1145 = vmatprep.subr.bf16.mxu0 0
        %1146 = vmatpush1.bf16.msra.mxu0 %v1143
        %1147 = vmatprep.subr.bf16.mxu0 0
        %1148 = vmatpush1.bf16.msra.mxu0 0
        %1149 = vmatprep.subr.bf16.mxu0 0
        %1150 = vmatpush1.bf16.msra.mxu0 0
        %1151 = vmatprep.subr.bf16.mxu0 0
        %1152 = vmatpush1.bf16.msra.mxu0 0
        %1153 = vmatprep.subr.bf16.mxu0 0
        %1154 = vmatpush1.bf16.msra.mxu0 0
        %1155 = vmatprep.subr.bf16.mxu0 0
        %1156 = vmatpush1.bf16.msra.mxu0 0
        %1157 = vmatprep.subr.bf16.mxu0 0
        %1158 = vmatpush1.bf16.msra.mxu0 0
        %1159 = vmatprep.subr.bf16.mxu0 0
        %1160 = vmatpush1.bf16.msra.mxu0 0
        %1161 = vmatprep.subr.bf16.mxu0 0
        %1162 = vmatpush1.bf16.msra.mxu0 0
        %1163 = vmatprep.subr.bf16.mxu0 0
        %1164 = vmatpush1.bf16.msra.mxu0 0
        %1165 = vmatprep.subr.bf16.mxu0 0
        %1166 = vmatpush1.bf16.msra.mxu0 0
        %1167 = vmatprep.subr.bf16.mxu0 0
        %1168 = vmatpush1.bf16.msra.mxu0 0
        %1169 = vmatprep.subr.bf16.mxu0 0
        %1170 = vmatpush1.bf16.msra.mxu0 0
        %1171 = vmatprep.subr.bf16.mxu0 0
        %1172 = vmatpush1.bf16.msra.mxu0 0
        %1173 = vmatprep.subr.bf16.mxu0 0
        %1174 = vmatpush1.bf16.msra.mxu0 0
        %1175 = vmatprep.subr.bf16.mxu0 0
        %1176 = vmatpush1.bf16.msra.mxu0 0
        %1177 = vmatprep.mubr.bf16.mxu0 0
        %1178 = vmatmul.mubr.bf16.gmra.mrb[0].mxu0 %v1140
        %v1179 = vpop.f32.mrb[0].mxu0
        %v1180 = vadd.f32 0.0, %v1179
        %v1181 = vpop.f32.mrb[0].mxu0
        %v1182 = vpop.f32.mrb[0].mxu0
        %v1183 = vpop.f32.mrb[0].mxu0
        %1184 = vdwg.mxu0
        %v1185 = vpack.c.bf16 %v1036, %v1036
        %v1186 = vpack.c.bf16 %v1084, %v1084
        %v1187 = vpack.c.bf16 %v1132, %v1132
        %v1188 = vpack.c.bf16 %v1180, %v1180
        %v1190 = vsel %vm750, %v1185, 0
        %v1193 = vsel %vm997, %v589, 0
        %1195 = vmatprep.subr.bf16.mxu0 0
        %1196 = vmatpush1.bf16.msra.mxu0 %v1193
        %1197 = vmatprep.subr.bf16.mxu0 0
        %1198 = vmatpush1.bf16.msra.mxu0 0
        %1199 = vmatprep.subr.bf16.mxu0 0
        %1200 = vmatpush1.bf16.msra.mxu0 0
        %1201 = vmatprep.subr.bf16.mxu0 0
        %1202 = vmatpush1.bf16.msra.mxu0 0
        %1203 = vmatprep.subr.bf16.mxu0 0
        %1204 = vmatpush1.bf16.msra.mxu0 0
        %1205 = vmatprep.subr.bf16.mxu0 0
        %1206 = vmatpush1.bf16.msra.mxu0 0
        %1207 = vmatprep.subr.bf16.mxu0 0
        %1208 = vmatpush1.bf16.msra.mxu0 0
        %1209 = vmatprep.subr.bf16.mxu0 0
        %1210 = vmatpush1.bf16.msra.mxu0 0
        %1211 = vmatprep.subr.bf16.mxu0 0
        %1212 = vmatpush1.bf16.msra.mxu0 0
        %1213 = vmatprep.subr.bf16.mxu0 0
        %1214 = vmatpush1.bf16.msra.mxu0 0
        %1215 = vmatprep.subr.bf16.mxu0 0
        %1216 = vmatpush1.bf16.msra.mxu0 0
        %1217 = vmatprep.subr.bf16.mxu0 0
        %1218 = vmatpush1.bf16.msra.mxu0 0
        %1219 = vmatprep.subr.bf16.mxu0 0
        %1220 = vmatpush1.bf16.msra.mxu0 0
        %1221 = vmatprep.subr.bf16.mxu0 0
        %1222 = vmatpush1.bf16.msra.mxu0 0
        %1223 = vmatprep.subr.bf16.mxu0 0
        %1224 = vmatpush1.bf16.msra.mxu0 0
        %1225 = vmatprep.subr.bf16.mxu0 0
        %1226 = vmatpush1.bf16.msra.mxu0 0
        %1227 = vmatprep.mubr.bf16.mxu0 0
        %1228 = vmatmul.mubr.bf16.gmra.mrb[0].mxu0 %v1190
        %v1229 = vpop.f32.mrb[0].mxu0
        %v1230 = vadd.f32 0.0, %v1229
        %v1231 = vpop.f32.mrb[0].mxu0
        %v1232 = vpop.f32.mrb[0].mxu0
        %v1233 = vpop.f32.mrb[0].mxu0
        %1234 = vdwg.mxu0
        %v1236 = vsel %vm750, %v1186, 0
        %v1239 = vsel %vm997, %v590, 0
        %1241 = vmatprep.subr.bf16.mxu0 0
        %1242 = vmatpush1.bf16.msra.mxu0 %v1239
        %1243 = vmatprep.subr.bf16.mxu0 0
        %1244 = vmatpush1.bf16.msra.mxu0 0
        %1245 = vmatprep.subr.bf16.mxu0 0
        %1246 = vmatpush1.bf16.msra.mxu0 0
        %1247 = vmatprep.subr.bf16.mxu0 0
        %1248 = vmatpush1.bf16.msra.mxu0 0
        %1249 = vmatprep.subr.bf16.mxu0 0
        %1250 = vmatpush1.bf16.msra.mxu0 0
        %1251 = vmatprep.subr.bf16.mxu0 0
        %1252 = vmatpush1.bf16.msra.mxu0 0
        %1253 = vmatprep.subr.bf16.mxu0 0
        %1254 = vmatpush1.bf16.msra.mxu0 0
        %1255 = vmatprep.subr.bf16.mxu0 0
        %1256 = vmatpush1.bf16.msra.mxu0 0
        %1257 = vmatprep.subr.bf16.mxu0 0
        %1258 = vmatpush1.bf16.msra.mxu0 0
        %1259 = vmatprep.subr.bf16.mxu0 0
        %1260 = vmatpush1.bf16.msra.mxu0 0
        %1261 = vmatprep.subr.bf16.mxu0 0
        %1262 = vmatpush1.bf16.msra.mxu0 0
        %1263 = vmatprep.subr.bf16.mxu0 0
        %1264 = vmatpush1.bf16.msra.mxu0 0
        %1265 = vmatprep.subr.bf16.mxu0 0
        %1266 = vmatpush1.bf16.msra.mxu0 0
        %1267 = vmatprep.subr.bf16.mxu0 0
        %1268 = vmatpush1.bf16.msra.mxu0 0
        %1269 = vmatprep.subr.bf16.mxu0 0
        %1270 = vmatpush1.bf16.msra.mxu0 0
        %1271 = vmatprep.subr.bf16.mxu0 0
        %1272 = vmatpush1.bf16.msra.mxu0 0
        %1273 = vmatprep.mubr.bf16.mxu0 0
        %1274 = vmatmul.mubr.bf16.gmra.mrb[0].mxu0 %v1236
        %v1275 = vpop.f32.mrb[0].mxu0
        %v1276 = vadd.f32 0.0, %v1275
        %v1277 = vpop.f32.mrb[0].mxu0
        %v1278 = vpop.f32.mrb[0].mxu0
        %v1279 = vpop.f32.mrb[0].mxu0
        %1280 = vdwg.mxu0
        %v1282 = vsel %vm750, %v1187, 0
        %v1285 = vsel %vm997, %v591, 0
        %1287 = vmatprep.subr.bf16.mxu0 0
        %1288 = vmatpush1.bf16.msra.mxu0 %v1285
        %1289 = vmatprep.subr.bf16.mxu0 0
        %1290 = vmatpush1.bf16.msra.mxu0 0
        %1291 = vmatprep.subr.bf16.mxu0 0
        %1292 = vmatpush1.bf16.msra.mxu0 0
        %1293 = vmatprep.subr.bf16.mxu0 0
        %1294 = vmatpush1.bf16.msra.mxu0 0
        %1295 = vmatprep.subr.bf16.mxu0 0
        %1296 = vmatpush1.bf16.msra.mxu0 0
        %1297 = vmatprep.subr.bf16.mxu0 0
        %1298 = vmatpush1.bf16.msra.mxu0 0
        %1299 = vmatprep.subr.bf16.mxu0 0
        %1300 = vmatpush1.bf16.msra.mxu0 0
        %1301 = vmatprep.subr.bf16.mxu0 0
        %1302 = vmatpush1.bf16.msra.mxu0 0
        %1303 = vmatprep.subr.bf16.mxu0 0
        %1304 = vmatpush1.bf16.msra.mxu0 0
        %1305 = vmatprep.subr.bf16.mxu0 0
        %1306 = vmatpush1.bf16.msra.mxu0 0
        %1307 = vmatprep.subr.bf16.mxu0 0
        %1308 = vmatpush1.bf16.msra.mxu0 0
        %1309 = vmatprep.subr.bf16.mxu0 0
        %1310 = vmatpush1.bf16.msra.mxu0 0
        %1311 = vmatprep.subr.bf16.mxu0 0
        %1312 = vmatpush1.bf16.msra.mxu0 0
        %1313 = vmatprep.subr.bf16.mxu0 0
        %1314 = vmatpush1.bf16.msra.mxu0 0
        %1315 = vmatprep.subr.bf16.mxu0 0
        %1316 = vmatpush1.bf16.msra.mxu0 0
        %1317 = vmatprep.subr.bf16.mxu0 0
        %1318 = vmatpush1.bf16.msra.mxu0 0
        %1319 = vmatprep.mubr.bf16.mxu0 0
        %1320 = vmatmul.mubr.bf16.gmra.mrb[0].mxu0 %v1282
        %v1321 = vpop.f32.mrb[0].mxu0
        %v1322 = vadd.f32 0.0, %v1321
        %v1323 = vpop.f32.mrb[0].mxu0
        %v1324 = vpop.f32.mrb[0].mxu0
        %v1325 = vpop.f32.mrb[0].mxu0
        %1326 = vdwg.mxu0
        %v1328 = vsel %vm750, %v1188, 0
        %v1331 = vsel %vm997, %v592, 0
        %1333 = vmatprep.subr.bf16.mxu0 0
        %1334 = vmatpush1.bf16.msra.mxu0 %v1331
        %1335 = vmatprep.subr.bf16.mxu0 0
        %1336 = vmatpush1.bf16.msra.mxu0 0
        %1337 = vmatprep.subr.bf16.mxu0 0
        %1338 = vmatpush1.bf16.msra.mxu0 0
        %1339 = vmatprep.subr.bf16.mxu0 0
        %1340 = vmatpush1.bf16.msra.mxu0 0
        %1341 = vmatprep.subr.bf16.mxu0 0
        %1342 = vmatpush1.bf16.msra.mxu0 0
        %1343 = vmatprep.subr.bf16.mxu0 0
        %1344 = vmatpush1.bf16.msra.mxu0 0
        %1345 = vmatprep.subr.bf16.mxu0 0
        %1346 = vmatpush1.bf16.msra.mxu0 0
        %1347 = vmatprep.subr.bf16.mxu0 0
        %1348 = vmatpush1.bf16.msra.mxu0 0
        %1349 = vmatprep.subr.bf16.mxu0 0
        %1350 = vmatpush1.bf16.msra.mxu0 0
        %1351 = vmatprep.subr.bf16.mxu0 0
        %1352 = vmatpush1.bf16.msra.mxu0 0
        %1353 = vmatprep.subr.bf16.mxu0 0
        %1354 = vmatpush1.bf16.msra.mxu0 0
        %1355 = vmatprep.subr.bf16.mxu0 0
        %1356 = vmatpush1.bf16.msra.mxu0 0
        %1357 = vmatprep.subr.bf16.mxu0 0
        %1358 = vmatpush1.bf16.msra.mxu0 0
        %1359 = vmatprep.subr.bf16.mxu0 0
        %1360 = vmatpush1.bf16.msra.mxu0 0
        %1361 = vmatprep.subr.bf16.mxu0 0
        %1362 = vmatpush1.bf16.msra.mxu0 0
        %1363 = vmatprep.subr.bf16.mxu0 0
        %1364 = vmatpush1.bf16.msra.mxu0 0
        %1365 = vmatprep.mubr.bf16.mxu0 0
        %1366 = vmatmul.mubr.bf16.gmra.mrb[0].mxu0 %v1328
        %v1367 = vpop.f32.mrb[0].mxu0
        %v1368 = vadd.f32 0.0, %v1367
        %v1369 = vpop.f32.mrb[0].mxu0
        %v1370 = vpop.f32.mrb[0].mxu0
        %v1371 = vpop.f32.mrb[0].mxu0
        %1372 = vdwg.mxu0
        %v1373 = vsel %vm689, %v1230, 0.0
        %v1374 = vsel %vm689, %v1276, 0.0
        %v1375 = vadd.f32 %v1373, %v1374
        %v1376 = vsel %vm689, %v1322, 0.0
        %v1377 = vadd.f32 %v1375, %v1376
        %v1378 = vsel %vm689, %v1368, 0.0
        %v1379 = vadd.f32 %v1377, %v1378
        %v1381 = vlaneseq
        %v1382 = vshrl.u32 %v1381, 7
        %v1383 = vsub.s32 0, %v1382
        %v1384 = vrot.slane %v593, %v1383
        %v1386 = vadd.f32 %v1379, %v1384
        %v1387 = vadd.f32 %v665, %v1386
        %v1388 = vsel %vm689, %v1387, 0.0
        %1389 = vadd.xlane.f32.xlu0 %v1388
        %v1390 = vpop.xlane.xlu0 %1389
        %v1391 = vrcp.pop 32.0
        %v1392 = vmul.f32 %v1390, %v1391
        %v1393 = vsub.f32 %v1387, %v1392
        %v1394 = vmul.f32 %v1393, %v1393
        %v1395 = vsel %vm689, %v1394, 0.0
        %1396 = vadd.xlane.f32.xlu0 %v1395
        %v1397 = vpop.xlane.xlu0 %1396
        %v1398 = vmul.f32 %v1397, %v1391
        %v1399 = vadd.f32 %v1398, 1e-12
        %v1400 = vrsqrt.pop %v1399
        %v1401 = vmul.f32 %v1393, %v1400
        %v1403 = vlaneseq
        %v1404 = vshrl.u32 %v1403, 7
        %v1405 = vsub.s32 0, %v1404
        %v1406 = vrot.slane %v594, %v1405
        %v1408 = vmul.f32 %v1401, %v1406
        %v1410 = vlaneseq
        %v1411 = vshrl.u32 %v1410, 7
        %v1412 = vsub.s32 0, %v1411
        %v1413 = vrot.slane %v595, %v1412
        %v1415 = vadd.f32 %v1408, %v1413
        %v1416 = vpack.c.bf16 %v1415, %v1415
        %v1418 = vlaneseq
        %v1419 = vshrl.u32 %v1418, 7
        %v1420 = vsub.s32 0, %v1419
        %v1421 = vrot.slane %v600, %v1420
        %v1427 = vunpack.c.l.b16 %v596
        %v1428 = vunpack.c.l.b16 %v597
        %v1429 = vunpack.c.l.b16 %v598
        %v1430 = vunpack.c.l.b16 %v599
        %v1431 = vpack.c.b16 %v1428, %v1427
        %v1432 = vpack.c.b16 %v1430, %v1429
        %v1436 = vsel %vm689, %v1416, 0
        %1438 = vmatprep.subr.bf16.mxu0 0
        %1439 = vmatpush1.bf16.msra.mxu0 %v1431
        %1440 = vmatprep.subr.bf16.mxu0 0
        %1441 = vmatpush1.bf16.msra.mxu0 %v1432
        %1442 = vmatprep.subr.bf16.mxu0 0
        %1443 = vmatpush1.bf16.msra.mxu0 0
        %1444 = vmatprep.subr.bf16.mxu0 0
        %1445 = vmatpush1.bf16.msra.mxu0 0
        %1446 = vmatprep.subr.bf16.mxu0 0
        %1447 = vmatpush1.bf16.msra.mxu0 0
        %1448 = vmatprep.subr.bf16.mxu0 0
        %1449 = vmatpush1.bf16.msra.mxu0 0
        %1450 = vmatprep.subr.bf16.mxu0 0
        %1451 = vmatpush1.bf16.msra.mxu0 0
        %1452 = vmatprep.subr.bf16.mxu0 0
        %1453 = vmatpush1.bf16.msra.mxu0 0
        %1454 = vmatprep.subr.bf16.mxu0 0
        %1455 = vmatpush1.bf16.msra.mxu0 0
        %1456 = vmatprep.subr.bf16.mxu0 0
        %1457 = vmatpush1.bf16.msra.mxu0 0
        %1458 = vmatprep.subr.bf16.mxu0 0
        %1459 = vmatpush1.bf16.msra.mxu0 0
        %1460 = vmatprep.subr.bf16.mxu0 0
        %1461 = vmatpush1.bf16.msra.mxu0 0
        %1462 = vmatprep.subr.bf16.mxu0 0
        %1463 = vmatpush1.bf16.msra.mxu0 0
        %1464 = vmatprep.subr.bf16.mxu0 0
        %1465 = vmatpush1.bf16.msra.mxu0 0
        %1466 = vmatprep.subr.bf16.mxu0 0
        %1467 = vmatpush1.bf16.msra.mxu0 0
        %1468 = vmatprep.subr.bf16.mxu0 0
        %1469 = vmatpush1.bf16.msra.mxu0 0
        %1470 = vmatprep.mubr.bf16.mxu0 0
        %1471 = vmatmul.mubr.bf16.gmra.mrb[0].mxu0 %v1436
        %v1472 = vpop.f32.mrb[0].mxu0
        %v1473 = vadd.f32 %v1421, %v1472
        %v1474 = vpop.f32.mrb[0].mxu0
        %v1475 = vpop.f32.mrb[0].mxu0
        %v1476 = vpop.f32.mrb[0].mxu0
        %1477 = vdwg.mxu0
        %v1478 = vmul.f32 %v1473, 0.5
        %v1479 = vmul.f32 %v1473, 0.044715
        %v1480 = vmul.f32 %v1479, %v1473
        %v1481 = vmul.f32 %v1480, %v1473
        %v1482 = vadd.f32 %v1473, %v1481
        %v1483 = vmul.f32 %v1482, 0.7978846
        %v1484 = vtanh.pop %v1483
        %v1485 = vadd.f32 %v1484, 1.0
        %v1486 = vmul.f32 %v1478, %v1485
        %v1487 = vpack.c.bf16 %v1486, %v1486
        %v1489 = vlaneseq
        %v1490 = vshrl.u32 %v1489, 7
        %v1491 = vsub.s32 0, %v1490
        %v1492 = vrot.slane %v609, %v1491
        %v1502 = vunpack.c.l.b16 %v601
        %v1503 = vunpack.c.l.b16 %v602
        %v1504 = vunpack.c.l.b16 %v603
        %v1505 = vunpack.c.l.b16 %v604
        %v1506 = vunpack.c.l.b16 %v605
        %v1507 = vunpack.c.l.b16 %v606
        %v1508 = vunpack.c.l.b16 %v607
        %v1509 = vunpack.c.l.b16 %v608
        %v1510 = vpack.c.b16 %v1503, %v1502
        %v1511 = vpack.c.b16 %v1505, %v1504
        %v1512 = vpack.c.b16 %v1507, %v1506
        %v1513 = vpack.c.b16 %v1509, %v1508
        %vm1518 = vcmask 523264
        %v1520 = vsel %vm1518, %v1487, 0
        %1522 = vmatprep.subr.bf16.mxu0 0
        %1523 = vmatpush1.bf16.msra.mxu0 %v1510
        %1524 = vmatprep.subr.bf16.mxu0 0
        %1525 = vmatpush1.bf16.msra.mxu0 %v1511
        %1526 = vmatprep.subr.bf16.mxu0 0
        %1527 = vmatpush1.bf16.msra.mxu0 %v1512
        %1528 = vmatprep.subr.bf16.mxu0 0
        %1529 = vmatpush1.bf16.msra.mxu0 %v1513
        %1530 = vmatprep.subr.bf16.mxu0 0
        %1531 = vmatpush1.bf16.msra.mxu0 0
        %1532 = vmatprep.subr.bf16.mxu0 0
        %1533 = vmatpush1.bf16.msra.mxu0 0
        %1534 = vmatprep.subr.bf16.mxu0 0
        %1535 = vmatpush1.bf16.msra.mxu0 0
        %1536 = vmatprep.subr.bf16.mxu0 0
        %1537 = vmatpush1.bf16.msra.mxu0 0
        %1538 = vmatprep.subr.bf16.mxu0 0
        %1539 = vmatpush1.bf16.msra.mxu0 0
        %1540 = vmatprep.subr.bf16.mxu0 0
        %1541 = vmatpush1.bf16.msra.mxu0 0
        %1542 = vmatprep.subr.bf16.mxu0 0
        %1543 = vmatpush1.bf16.msra.mxu0 0
        %1544 = vmatprep.subr.bf16.mxu0 0
        %1545 = vmatpush1.bf16.msra.mxu0 0
        %1546 = vmatprep.subr.bf16.mxu0 0
        %1547 = vmatpush1.bf16.msra.mxu0 0
        %1548 = vmatprep.subr.bf16.mxu0 0
        %1549 = vmatpush1.bf16.msra.mxu0 0
        %1550 = vmatprep.subr.bf16.mxu0 0
        %1551 = vmatpush1.bf16.msra.mxu0 0
        %1552 = vmatprep.subr.bf16.mxu0 0
        %1553 = vmatpush1.bf16.msra.mxu0 0
        %1554 = vmatprep.mubr.bf16.mxu0 0
        %1555 = vmatmul.mubr.bf16.gmra.mrb[0].mxu0 %v1520
        %v1556 = vpop.f32.mrb[0].mxu0
        %v1557 = vadd.f32 %v1492, %v1556
        %v1558 = vpop.f32.mrb[0].mxu0
        %v1559 = vpop.f32.mrb[0].mxu0
        %v1560 = vpop.f32.mrb[0].mxu0
        %1561 = vdwg.mxu0
        %v1562 = vadd.f32 %v1415, %v1557
        %v1563 = vsel %vm689, %v1562, 0.0
        %1564 = vadd.xlane.f32.xlu0 %v1563
        %v1565 = vpop.xlane.xlu0 %1564
        %v1566 = vmul.f32 %v1565, %v1391
        %v1567 = vsub.f32 %v1562, %v1566
        %v1568 = vmul.f32 %v1567, %v1567
        %v1569 = vsel %vm689, %v1568, 0.0
        %1570 = vadd.xlane.f32.xlu0 %v1569
        %v1571 = vpop.xlane.xlu0 %1570
        %v1572 = vmul.f32 %v1571, %v1391
        %v1573 = vadd.f32 %v1572, 1e-12
        %v1574 = vrsqrt.pop %v1573
        %v1575 = vmul.f32 %v1567, %v1574
        %v1577 = vlaneseq
        %v1578 = vshrl.u32 %v1577, 7
        %v1579 = vsub.s32 0, %v1578
        %v1580 = vrot.slane %v610, %v1579
        %v1582 = vmul.f32 %v1575, %v1580
        %v1584 = vlaneseq
        %v1585 = vshrl.u32 %v1584, 7
        %v1586 = vsub.s32 0, %v1585
        %v1587 = vrot.slane %v611, %v1586
        %v1589 = vadd.f32 %v1582, %v1587
        %v1590 = vpack.c.bf16 %v1589, %v1589
        %v1592 = vsel %vm689, %v1590, 0
        %1594 = vmatprep.subr.bf16.mxu0 0
        %1595 = vmatpush1.bf16.msra.mxu0 %v685
        %1596 = vmatprep.subr.bf16.mxu0 0
        %1597 = vmatpush1.bf16.msra.mxu0 %v686
        %1598 = vmatprep.subr.bf16.mxu0 0
        %1599 = vmatpush1.bf16.msra.mxu0 0
        %1600 = vmatprep.subr.bf16.mxu0 0
        %1601 = vmatpush1.bf16.msra.mxu0 0
        %1602 = vmatprep.subr.bf16.mxu0 0
        %1603 = vmatpush1.bf16.msra.mxu0 0
        %1604 = vmatprep.subr.bf16.mxu0 0
        %1605 = vmatpush1.bf16.msra.mxu0 0
        %1606 = vmatprep.subr.bf16.mxu0 0
        %1607 = vmatpush1.bf16.msra.mxu0 0
        %1608 = vmatprep.subr.bf16.mxu0 0
        %1609 = vmatpush1.bf16.msra.mxu0 0
        %1610 = vmatprep.subr.bf16.mxu0 0
        %1611 = vmatpush1.bf16.msra.mxu0 0
        %1612 = vmatprep.subr.bf16.mxu0 0
        %1613 = vmatpush1.bf16.msra.mxu0 0
        %1614 = vmatprep.subr.bf16.mxu0 0
        %1615 = vmatpush1.bf16.msra.mxu0 0
        %1616 = vmatprep.subr.bf16.mxu0 0
        %1617 = vmatpush1.bf16.msra.mxu0 0
        %1618 = vmatprep.subr.bf16.mxu0 0
        %1619 = vmatpush1.bf16.msra.mxu0 0
        %1620 = vmatprep.subr.bf16.mxu0 0
        %1621 = vmatpush1.bf16.msra.mxu0 0
        %1622 = vmatprep.subr.bf16.mxu0 0
        %1623 = vmatpush1.bf16.msra.mxu0 0
        %1624 = vmatprep.subr.bf16.mxu0 0
        %1625 = vmatpush1.bf16.msra.mxu0 0
        %1626 = vmatprep.mubr.bf16.mxu0 0
        %1627 = vmatmul.mubr.bf16.gmra.mrb[0].mxu0 %v1592
        %v1628 = vpop.f32.mrb[0].mxu0
        %v1629 = vadd.f32 %v675, %v1628
        %v1630 = vpop.f32.mrb[0].mxu0
        %v1631 = vpop.f32.mrb[0].mxu0
        %v1632 = vpop.f32.mrb[0].mxu0
        %1633 = vdwg.mxu0
        %1635 = vrot.lane.b32.xlu0 %v1629, 120
        %v1636 = vpop.permute.xlu0 %1635
        %1638 = vrot.lane.b32.xlu0 %v1629, 112
        %v1639 = vpop.permute.xlu0 %1638
        %1641 = vrot.lane.b32.xlu0 %v1629, 104
        %v1642 = vpop.permute.xlu0 %1641
        %v1644 = vpack.c.bf16 %v1629, %v1629
        %v1645 = vpack.c.bf16 %v1636, %v1636
        %v1646 = vpack.c.bf16 %v1639, %v1639
        %v1647 = vpack.c.bf16 %v1642, %v1642
        %1649 = vrot.lane.b32.xlu0 %v1644, 96
        %v1650 = vpop.permute.xlu0 %1649
        %v1652 = vsel %vm750, %v1644, 0
        %v1655 = vsel %vm750, %v1650, 0
        %1657 = vmatprep.subr.bf16.mxu0 0
        %1658 = vmatpush1.bf16.xpose.msra.mxu0 %v1655
        %1659 = vmatprep.subr.bf16.mxu0 0
        %1660 = vmatpush1.bf16.xpose.msra.mxu0 0
        %1661 = vmatprep.subr.bf16.mxu0 0
        %1662 = vmatpush1.bf16.xpose.msra.mxu0 0
        %1663 = vmatprep.subr.bf16.mxu0 0
        %1664 = vmatpush1.bf16.xpose.msra.mxu0 0
        %1665 = vmatprep.subr.bf16.mxu0 0
        %1666 = vmatpush1.bf16.xpose.msra.mxu0 0
        %1667 = vmatprep.subr.bf16.mxu0 0
        %1668 = vmatpush1.bf16.xpose.msra.mxu0 0
        %1669 = vmatprep.subr.bf16.mxu0 0
        %1670 = vmatpush1.bf16.xpose.msra.mxu0 0
        %1671 = vmatprep.subr.bf16.mxu0 0
        %1672 = vmatpush1.bf16.xpose.msra.mxu0 0
        %1673 = vmatprep.subr.bf16.mxu0 0
        %1674 = vmatpush1.bf16.xpose.msra.mxu0 0
        %1675 = vmatprep.subr.bf16.mxu0 0
        %1676 = vmatpush1.bf16.xpose.msra.mxu0 0
        %1677 = vmatprep.subr.bf16.mxu0 0
        %1678 = vmatpush1.bf16.xpose.msra.mxu0 0
        %1679 = vmatprep.subr.bf16.mxu0 0
        %1680 = vmatpush1.bf16.xpose.msra.mxu0 0
        %1681 = vmatprep.subr.bf16.mxu0 0
        %1682 = vmatpush1.bf16.xpose.msra.mxu0 0
        %1683 = vmatprep.subr.bf16.mxu0 0
        %1684 = vmatpush1.bf16.xpose.msra.mxu0 0
        %1685 = vmatprep.subr.bf16.mxu0 0
        %1686 = vmatpush1.bf16.xpose.msra.mxu0 0
        %1687 = vmatprep.subr.bf16.mxu0 0
        %1688 = vmatpush1.bf16.xpose.msra.mxu0 0
        %1689 = vmatprep.mubr.bf16.mxu0 0
        %1690 = vmatmul.mubr.bf16.gmra.mrb[0].mxu0 %v1652
        %v1691 = vpop.f32.mrb[0].mxu0
        %v1692 = vadd.f32 0.0, %v1691
        %v1693 = vpop.f32.mrb[0].mxu0
        %v1694 = vpop.f32.mrb[0].mxu0
        %v1695 = vpop.f32.mrb[0].mxu0
        %1696 = vdwg.mxu0
        %1698 = vrot.lane.b32.xlu0 %v1645, 96
        %v1699 = vpop.permute.xlu0 %1698
        %v1701 = vsel %vm750, %v1645, 0
        %v1704 = vsel %vm750, %v1699, 0
        %1706 = vmatprep.subr.bf16.mxu0 0
        %1707 = vmatpush1.bf16.xpose.msra.mxu0 %v1704
        %1708 = vmatprep.subr.bf16.mxu0 0
        %1709 = vmatpush1.bf16.xpose.msra.mxu0 0
        %1710 = vmatprep.subr.bf16.mxu0 0
        %1711 = vmatpush1.bf16.xpose.msra.mxu0 0
        %1712 = vmatprep.subr.bf16.mxu0 0
        %1713 = vmatpush1.bf16.xpose.msra.mxu0 0
        %1714 = vmatprep.subr.bf16.mxu0 0
        %1715 = vmatpush1.bf16.xpose.msra.mxu0 0
        %1716 = vmatprep.subr.bf16.mxu0 0
        %1717 = vmatpush1.bf16.xpose.msra.mxu0 0
        %1718 = vmatprep.subr.bf16.mxu0 0
        %1719 = vmatpush1.bf16.xpose.msra.mxu0 0
        %1720 = vmatprep.subr.bf16.mxu0 0
        %1721 = vmatpush1.bf16.xpose.msra.mxu0 0
        %1722 = vmatprep.subr.bf16.mxu0 0
        %1723 = vmatpush1.bf16.xpose.msra.mxu0 0
        %1724 = vmatprep.subr.bf16.mxu0 0
        %1725 = vmatpush1.bf16.xpose.msra.mxu0 0
        %1726 = vmatprep.subr.bf16.mxu0 0
        %1727 = vmatpush1.bf16.xpose.msra.mxu0 0
        %1728 = vmatprep.subr.bf16.mxu0 0
        %1729 = vmatpush1.bf16.xpose.msra.mxu0 0
        %1730 = vmatprep.subr.bf16.mxu0 0
        %1731 = vmatpush1.bf16.xpose.msra.mxu0 0
        %1732 = vmatprep.subr.bf16.mxu0 0
        %1733 = vmatpush1.bf16.xpose.msra.mxu0 0
        %1734 = vmatprep.subr.bf16.mxu0 0
        %1735 = vmatpush1.bf16.xpose.msra.mxu0 0
        %1736 = vmatprep.subr.bf16.mxu0 0
        %1737 = vmatpush1.bf16.xpose.msra.mxu0 0
        %1738 = vmatprep.mubr.bf16.mxu0 0
        %1739 = vmatmul.mubr.bf16.gmra.mrb[0].mxu0 %v1701
        %v1740 = vpop.f32.mrb[0].mxu0
        %v1741 = vadd.f32 0.0, %v1740
        %v1742 = vpop.f32.mrb[0].mxu0
        %v1743 = vpop.f32.mrb[0].mxu0
        %v1744 = vpop.f32.mrb[0].mxu0
        %1745 = vdwg.mxu0
        %1747 = vrot.lane.b32.xlu0 %v1646, 96
        %v1748 = vpop.permute.xlu0 %1747
        %v1750 = vsel %vm750, %v1646, 0
        %v1753 = vsel %vm750, %v1748, 0
        %1755 = vmatprep.subr.bf16.mxu0 0
        %1756 = vmatpush1.bf16.xpose.msra.mxu0 %v1753
        %1757 = vmatprep.subr.bf16.mxu0 0
        %1758 = vmatpush1.bf16.xpose.msra.mxu0 0
        %1759 = vmatprep.subr.bf16.mxu0 0
        %1760 = vmatpush1.bf16.xpose.msra.mxu0 0
        %1761 = vmatprep.subr.bf16.mxu0 0
        %1762 = vmatpush1.bf16.xpose.msra.mxu0 0
        %1763 = vmatprep.subr.bf16.mxu0 0
        %1764 = vmatpush1.bf16.xpose.msra.mxu0 0
        %1765 = vmatprep.subr.bf16.mxu0 0
        %1766 = vmatpush1.bf16.xpose.msra.mxu0 0
        %1767 = vmatprep.subr.bf16.mxu0 0
        %1768 = vmatpush1.bf16.xpose.msra.mxu0 0
        %1769 = vmatprep.subr.bf16.mxu0 0
        %1770 = vmatpush1.bf16.xpose.msra.mxu0 0
        %1771 = vmatprep.subr.bf16.mxu0 0
        %1772 = vmatpush1.bf16.xpose.msra.mxu0 0
        %1773 = vmatprep.subr.bf16.mxu0 0
        %1774 = vmatpush1.bf16.xpose.msra.mxu0 0
        %1775 = vmatprep.subr.bf16.mxu0 0
        %1776 = vmatpush1.bf16.xpose.msra.mxu0 0
        %1777 = vmatprep.subr.bf16.mxu0 0
        %1778 = vmatpush1.bf16.xpose.msra.mxu0 0
        %1779 = vmatprep.subr.bf16.mxu0 0
        %1780 = vmatpush1.bf16.xpose.msra.mxu0 0
        %1781 = vmatprep.subr.bf16.mxu0 0
        %1782 = vmatpush1.bf16.xpose.msra.mxu0 0
        %1783 = vmatprep.subr.bf16.mxu0 0
        %1784 = vmatpush1.bf16.xpose.msra.mxu0 0
        %1785 = vmatprep.subr.bf16.mxu0 0
        %1786 = vmatpush1.bf16.xpose.msra.mxu0 0
        %1787 = vmatprep.mubr.bf16.mxu0 0
        %1788 = vmatmul.mubr.bf16.gmra.mrb[0].mxu0 %v1750
        %v1789 = vpop.f32.mrb[0].mxu0
        %v1790 = vadd.f32 0.0, %v1789
        %v1791 = vpop.f32.mrb[0].mxu0
        %v1792 = vpop.f32.mrb[0].mxu0
        %v1793 = vpop.f32.mrb[0].mxu0
        %1794 = vdwg.mxu0
        %1796 = vrot.lane.b32.xlu0 %v1647, 96
        %v1797 = vpop.permute.xlu0 %1796
        %v1799 = vsel %vm750, %v1647, 0
        %v1802 = vsel %vm750, %v1797, 0
        %1804 = vmatprep.subr.bf16.mxu0 0
        %1805 = vmatpush1.bf16.xpose.msra.mxu0 %v1802
        %1806 = vmatprep.subr.bf16.mxu0 0
        %1807 = vmatpush1.bf16.xpose.msra.mxu0 0
        %1808 = vmatprep.subr.bf16.mxu0 0
        %1809 = vmatpush1.bf16.xpose.msra.mxu0 0
        %1810 = vmatprep.subr.bf16.mxu0 0
        %1811 = vmatpush1.bf16.xpose.msra.mxu0 0
        %1812 = vmatprep.subr.bf16.mxu0 0
        %1813 = vmatpush1.bf16.xpose.msra.mxu0 0
        %1814 = vmatprep.subr.bf16.mxu0 0
        %1815 = vmatpush1.bf16.xpose.msra.mxu0 0
        %1816 = vmatprep.subr.bf16.mxu0 0
        %1817 = vmatpush1.bf16.xpose.msra.mxu0 0
        %1818 = vmatprep.subr.bf16.mxu0 0
        %1819 = vmatpush1.bf16.xpose.msra.mxu0 0
        %1820 = vmatprep.subr.bf16.mxu0 0
        %1821 = vmatpush1.bf16.xpose.msra.mxu0 0
        %1822 = vmatprep.subr.bf16.mxu0 0
        %1823 = vmatpush1.bf16.xpose.msra.mxu0 0
        %1824 = vmatprep.subr.bf16.mxu0 0
        %1825 = vmatpush1.bf16.xpose.msra.mxu0 0
        %1826 = vmatprep.subr.bf16.mxu0 0
        %1827 = vmatpush1.bf16.xpose.msra.mxu0 0
        %1828 = vmatprep.subr.bf16.mxu0 0
        %1829 = vmatpush1.bf16.xpose.msra.mxu0 0
        %1830 = vmatprep.subr.bf16.mxu0 0
        %1831 = vmatpush1.bf16.xpose.msra.mxu0 0
        %1832 = vmatprep.subr.bf16.mxu0 0
        %1833 = vmatpush1.bf16.xpose.msra.mxu0 0
        %1834 = vmatprep.subr.bf16.mxu0 0
        %1835 = vmatpush1.bf16.xpose.msra.mxu0 0
        %1836 = vmatprep.mubr.bf16.mxu0 0
        %1837 = vmatmul.mubr.bf16.gmra.mrb[0].mxu0 %v1799
        %v1838 = vpop.f32.mrb[0].mxu0
        %v1839 = vadd.f32 0.0, %v1838
        %v1840 = vpop.f32.mrb[0].mxu0
        %v1841 = vpop.f32.mrb[0].mxu0
        %v1842 = vpop.f32.mrb[0].mxu0
        %1843 = vdwg.mxu0
        %v1844 = vsel %vm750, %v1692, -inf
        %1845 = vmax.xlane.f32.xlu0 %v1844
        %v1846 = vpop.xlane.xlu0 %1845
        %v1847 = vsel %vm750, %v1741, -inf
        %1848 = vmax.xlane.f32.xlu0 %v1847
        %v1849 = vpop.xlane.xlu0 %1848
        %v1850 = vsel %vm750, %v1790, -inf
        %1851 = vmax.xlane.f32.xlu0 %v1850
        %v1852 = vpop.xlane.xlu0 %1851
        %v1853 = vsel %vm750, %v1839, -inf
        %1854 = vmax.xlane.f32.xlu0 %v1853
        %v1855 = vpop.xlane.xlu0 %1854
        %v1856 = vsub.f32 %v1692, %v1846
        %v1857 = vsub.f32 %v1741, %v1849
        %v1858 = vsub.f32 %v1790, %v1852
        %v1859 = vsub.f32 %v1839, %v1855
        %v1860 = vmul.f32 %v1856, 1.442695
        %v1861 = vpow.pop %v1860
        %v1862 = vmul.f32 %v1857, 1.442695
        %v1863 = vpow.pop %v1862
        %v1864 = vmul.f32 %v1858, 1.442695
        %v1865 = vpow.pop %v1864
        %v1866 = vmul.f32 %v1859, 1.442695
        %v1867 = vpow.pop %v1866
        %v1868 = vsel %vm750, %v1861, 0.0
        %1869 = vadd.xlane.f32.xlu0 %v1868
        %v1870 = vpop.xlane.xlu0 %1869
        %v1871 = vsel %vm750, %v1863, 0.0
        %1872 = vadd.xlane.f32.xlu0 %v1871
        %v1873 = vpop.xlane.xlu0 %1872
        %v1874 = vsel %vm750, %v1865, 0.0
        %1875 = vadd.xlane.f32.xlu0 %v1874
        %v1876 = vpop.xlane.xlu0 %1875
        %v1877 = vsel %vm750, %v1867, 0.0
        %1878 = vadd.xlane.f32.xlu0 %v1877
        %v1879 = vpop.xlane.xlu0 %1878
        %v1880 = vrcp.pop %v1870
        %v1881 = vrcp.pop %v1873
        %v1882 = vrcp.pop %v1876
        %v1883 = vrcp.pop %v1879
        %v1884 = vmul.f32 %v1861, %v1880
        %v1885 = vmul.f32 %v1863, %v1881
        %v1886 = vmul.f32 %v1865, %v1882
        %v1887 = vmul.f32 %v1867, %v1883
        %v1888 = vpack.c.bf16 %v1884, %v1884
        %v1889 = vpack.c.bf16 %v1885, %v1885
        %v1890 = vpack.c.bf16 %v1886, %v1886
        %v1891 = vpack.c.bf16 %v1887, %v1887
        %1892 = vrot.lane.b32.xlu0 %v1644, 64
        %v1893 = vpop.permute.xlu0 %1892
        %v1895 = vsel %vm750, %v1888, 0
        %v1898 = vsel %vm997, %v1893, 0
        %1900 = vmatprep.subr.bf16.mxu0 0
        %1901 = vmatpush1.bf16.msra.mxu0 %v1898
        %1902 = vmatprep.subr.bf16.mxu0 0
        %1903 = vmatpush1.bf16.msra.mxu0 0
        %1904 = vmatprep.subr.bf16.mxu0 0
        %1905 = vmatpush1.bf16.msra.mxu0 0
        %1906 = vmatprep.subr.bf16.mxu0 0
        %1907 = vmatpush1.bf16.msra.mxu0 0
        %1908 = vmatprep.subr.bf16.mxu0 0
        %1909 = vmatpush1.bf16.msra.mxu0 0
        %1910 = vmatprep.subr.bf16.mxu0 0
        %1911 = vmatpush1.bf16.msra.mxu0 0
        %1912 = vmatprep.subr.bf16.mxu0 0
        %1913 = vmatpush1.bf16.msra.mxu0 0
        %1914 = vmatprep.subr.bf16.mxu0 0
        %1915 = vmatpush1.bf16.msra.mxu0 0
        %1916 = vmatprep.subr.bf16.mxu0 0
        %1917 = vmatpush1.bf16.msra.mxu0 0
        %1918 = vmatprep.subr.bf16.mxu0 0
        %1919 = vmatpush1.bf16.msra.mxu0 0
        %1920 = vmatprep.subr.bf16.mxu0 0
        %1921 = vmatpush1.bf16.msra.mxu0 0
        %1922 = vmatprep.subr.bf16.mxu0 0
        %1923 = vmatpush1.bf16.msra.mxu0 0
        %1924 = vmatprep.subr.bf16.mxu0 0
        %1925 = vmatpush1.bf16.msra.mxu0 0
        %1926 = vmatprep.subr.bf16.mxu0 0
        %1927 = vmatpush1.bf16.msra.mxu0 0
        %1928 = vmatprep.subr.bf16.mxu0 0
        %1929 = vmatpush1.bf16.msra.mxu0 0
        %1930 = vmatprep.subr.bf16.mxu0 0
        %1931 = vmatpush1.bf16.msra.mxu0 0
        %1932 = vmatprep.mubr.bf16.mxu0 0
        %1933 = vmatmul.mubr.bf16.gmra.mrb[0].mxu0 %v1895
        %v1934 = vpop.f32.mrb[0].mxu0
        %v1935 = vadd.f32 0.0, %v1934
        %v1936 = vpop.f32.mrb[0].mxu0
        %v1937 = vpop.f32.mrb[0].mxu0
        %v1938 = vpop.f32.mrb[0].mxu0
        %1939 = vdwg.mxu0
        %1940 = vrot.lane.b32.xlu0 %v1645, 64
        %v1941 = vpop.permute.xlu0 %1940
        %v1943 = vsel %vm750, %v1889, 0
        %v1946 = vsel %vm997, %v1941, 0
        %1948 = vmatprep.subr.bf16.mxu0 0
        %1949 = vmatpush1.bf16.msra.mxu0 %v1946
        %1950 = vmatprep.subr.bf16.mxu0 0
        %1951 = vmatpush1.bf16.msra.mxu0 0
        %1952 = vmatprep.subr.bf16.mxu0 0
        %1953 = vmatpush1.bf16.msra.mxu0 0
        %1954 = vmatprep.subr.bf16.mxu0 0
        %1955 = vmatpush1.bf16.msra.mxu0 0
        %1956 = vmatprep.subr.bf16.mxu0 0
        %1957 = vmatpush1.bf16.msra.mxu0 0
        %1958 = vmatprep.subr.bf16.mxu0 0
        %1959 = vmatpush1.bf16.msra.mxu0 0
        %1960 = vmatprep.subr.bf16.mxu0 0
        %1961 = vmatpush1.bf16.msra.mxu0 0
        %1962 = vmatprep.subr.bf16.mxu0 0
        %1963 = vmatpush1.bf16.msra.mxu0 0
        %1964 = vmatprep.subr.bf16.mxu0 0
        %1965 = vmatpush1.bf16.msra.mxu0 0
        %1966 = vmatprep.subr.bf16.mxu0 0
        %1967 = vmatpush1.bf16.msra.mxu0 0
        %1968 = vmatprep.subr.bf16.mxu0 0
        %1969 = vmatpush1.bf16.msra.mxu0 0
        %1970 = vmatprep.subr.bf16.mxu0 0
        %1971 = vmatpush1.bf16.msra.mxu0 0
        %1972 = vmatprep.subr.bf16.mxu0 0
        %1973 = vmatpush1.bf16.msra.mxu0 0
        %1974 = vmatprep.subr.bf16.mxu0 0
        %1975 = vmatpush1.bf16.msra.mxu0 0
        %1976 = vmatprep.subr.bf16.mxu0 0
        %1977 = vmatpush1.bf16.msra.mxu0 0
        %1978 = vmatprep.subr.bf16.mxu0 0
        %1979 = vmatpush1.bf16.msra.mxu0 0
        %1980 = vmatprep.mubr.bf16.mxu0 0
        %1981 = vmatmul.mubr.bf16.gmra.mrb[0].mxu0 %v1943
        %v1982 = vpop.f32.mrb[0].mxu0
        %v1983 = vadd.f32 0.0, %v1982
        %v1984 = vpop.f32.mrb[0].mxu0
        %v1985 = vpop.f32.mrb[0].mxu0
        %v1986 = vpop.f32.mrb[0].mxu0
        %1987 = vdwg.mxu0
        %1988 = vrot.lane.b32.xlu0 %v1646, 64
        %v1989 = vpop.permute.xlu0 %1988
        %v1991 = vsel %vm750, %v1890, 0
        %v1994 = vsel %vm997, %v1989, 0
        %1996 = vmatprep.subr.bf16.mxu0 0
        %1997 = vmatpush1.bf16.msra.mxu0 %v1994
        %1998 = vmatprep.subr.bf16.mxu0 0
        %1999 = vmatpush1.bf16.msra.mxu0 0
        %2000 = vmatprep.subr.bf16.mxu0 0
        %2001 = vmatpush1.bf16.msra.mxu0 0
        %2002 = vmatprep.subr.bf16.mxu0 0
        %2003 = vmatpush1.bf16.msra.mxu0 0
        %2004 = vmatprep.subr.bf16.mxu0 0
        %2005 = vmatpush1.bf16.msra.mxu0 0
        %2006 = vmatprep.subr.bf16.mxu0 0
        %2007 = vmatpush1.bf16.msra.mxu0 0
        %2008 = vmatprep.subr.bf16.mxu0 0
        %2009 = vmatpush1.bf16.msra.mxu0 0
        %2010 = vmatprep.subr.bf16.mxu0 0
        %2011 = vmatpush1.bf16.msra.mxu0 0
        %2012 = vmatprep.subr.bf16.mxu0 0
        %2013 = vmatpush1.bf16.msra.mxu0 0
        %2014 = vmatprep.subr.bf16.mxu0 0
        %2015 = vmatpush1.bf16.msra.mxu0 0
        %2016 = vmatprep.subr.bf16.mxu0 0
        %2017 = vmatpush1.bf16.msra.mxu0 0
        %2018 = vmatprep.subr.bf16.mxu0 0
        %2019 = vmatpush1.bf16.msra.mxu0 0
        %2020 = vmatprep.subr.bf16.mxu0 0
        %2021 = vmatpush1.bf16.msra.mxu0 0
        %2022 = vmatprep.subr.bf16.mxu0 0
        %2023 = vmatpush1.bf16.msra.mxu0 0
        %2024 = vmatprep.subr.bf16.mxu0 0
        %2025 = vmatpush1.bf16.msra.mxu0 0
        %2026 = vmatprep.subr.bf16.mxu0 0
        %2027 = vmatpush1.bf16.msra.mxu0 0
        %2028 = vmatprep.mubr.bf16.mxu0 0
        %2029 = vmatmul.mubr.bf16.gmra.mrb[0].mxu0 %v1991
        %v2030 = vpop.f32.mrb[0].mxu0
        %v2031 = vadd.f32 0.0, %v2030
        %v2032 = vpop.f32.mrb[0].mxu0
        %v2033 = vpop.f32.mrb[0].mxu0
        %v2034 = vpop.f32.mrb[0].mxu0
        %2035 = vdwg.mxu0
        %2036 = vrot.lane.b32.xlu0 %v1647, 64
        %v2037 = vpop.permute.xlu0 %2036
        %v2039 = vsel %vm750, %v1891, 0
        %v2042 = vsel %vm997, %v2037, 0
        %2044 = vmatprep.subr.bf16.mxu0 0
        %2045 = vmatpush1.bf16.msra.mxu0 %v2042
        %2046 = vmatprep.subr.bf16.mxu0 0
        %2047 = vmatpush1.bf16.msra.mxu0 0
        %2048 = vmatprep.subr.bf16.mxu0 0
        %2049 = vmatpush1.bf16.msra.mxu0 0
        %2050 = vmatprep.subr.bf16.mxu0 0
        %2051 = vmatpush1.bf16.msra.mxu0 0
        %2052 = vmatprep.subr.bf16.mxu0 0
        %2053 = vmatpush1.bf16.msra.mxu0 0
        %2054 = vmatprep.subr.bf16.mxu0 0
        %2055 = vmatpush1.bf16.msra.mxu0 0
        %2056 = vmatprep.subr.bf16.mxu0 0
        %2057 = vmatpush1.bf16.msra.mxu0 0
        %2058 = vmatprep.subr.bf16.mxu0 0
        %2059 = vmatpush1.bf16.msra.mxu0 0
        %2060 = vmatprep.subr.bf16.mxu0 0
        %2061 = vmatpush1.bf16.msra.mxu0 0
        %2062 = vmatprep.subr.bf16.mxu0 0
        %2063 = vmatpush1.bf16.msra.mxu0 0
        %2064 = vmatprep.subr.bf16.mxu0 0
        %2065 = vmatpush1.bf16.msra.mxu0 0
        %2066 = vmatprep.subr.bf16.mxu0 0
        %2067 = vmatpush1.bf16.msra.mxu0 0
        %2068 = vmatprep.subr.bf16.mxu0 0
        %2069 = vmatpush1.bf16.msra.mxu0 0
        %2070 = vmatprep.subr.bf16.mxu0 0
        %2071 = vmatpush1.bf16.msra.mxu0 0
        %2072 = vmatprep.subr.bf16.mxu0 0
        %2073 = vmatpush1.bf16.msra.mxu0 0
        %2074 = vmatprep.subr.bf16.mxu0 0
        %2075 = vmatpush1.bf16.msra.mxu0 0
        %2076 = vmatprep.mubr.bf16.mxu0 0
        %2077 = vmatmul.mubr.bf16.gmra.mrb[0].mxu0 %v2039
        %v2078 = vpop.f32.mrb[0].mxu0
        %v2079 = vadd.f32 0.0, %v2078
        %v2080 = vpop.f32.mrb[0].mxu0
        %v2081 = vpop.f32.mrb[0].mxu0
        %v2082 = vpop.f32.mrb[0].mxu0
        %2083 = vdwg.mxu0
        %v2084 = vpack.c.bf16 %v1935, %v1935
        %v2085 = vpack.c.bf16 %v1983, %v1983
        %v2086 = vpack.c.bf16 %v2031, %v2031
        %v2087 = vpack.c.bf16 %v2079, %v2079
        %v2089 = vsel %vm750, %v2084, 0
        %2091 = vmatprep.subr.bf16.mxu0 0
        %2092 = vmatpush1.bf16.msra.mxu0 %v1193
        %2093 = vmatprep.subr.bf16.mxu0 0
        %2094 = vmatpush1.bf16.msra.mxu0 0
        %2095 = vmatprep.subr.bf16.mxu0 0
        %2096 = vmatpush1.bf16.msra.mxu0 0
        %2097 = vmatprep.subr.bf16.mxu0 0
        %2098 = vmatpush1.bf16.msra.mxu0 0
        %2099 = vmatprep.subr.bf16.mxu0 0
        %2100 = vmatpush1.bf16.msra.mxu0 0
        %2101 = vmatprep.subr.bf16.mxu0 0
        %2102 = vmatpush1.bf16.msra.mxu0 0
        %2103 = vmatprep.subr.bf16.mxu0 0
        %2104 = vmatpush1.bf16.msra.mxu0 0
        %2105 = vmatprep.subr.bf16.mxu0 0
        %2106 = vmatpush1.bf16.msra.mxu0 0
        %2107 = vmatprep.subr.bf16.mxu0 0
        %2108 = vmatpush1.bf16.msra.mxu0 0
        %2109 = vmatprep.subr.bf16.mxu0 0
        %2110 = vmatpush1.bf16.msra.mxu0 0
        %2111 = vmatprep.subr.bf16.mxu0 0
        %2112 = vmatpush1.bf16.msra.mxu0 0
        %2113 = vmatprep.subr.bf16.mxu0 0
        %2114 = vmatpush1.bf16.msra.mxu0 0
        %2115 = vmatprep.subr.bf16.mxu0 0
        %2116 = vmatpush1.bf16.msra.mxu0 0
        %2117 = vmatprep.subr.bf16.mxu0 0
        %2118 = vmatpush1.bf16.msra.mxu0 0
        %2119 = vmatprep.subr.bf16.mxu0 0
        %2120 = vmatpush1.bf16.msra.mxu0 0
        %2121 = vmatprep.subr.bf16.mxu0 0
        %2122 = vmatpush1.bf16.msra.mxu0 0
        %2123 = vmatprep.mubr.bf16.mxu0 0
        %2124 = vmatmul.mubr.bf16.gmra.mrb[0].mxu0 %v2089
        %v2125 = vpop.f32.mrb[0].mxu0
        %v2126 = vadd.f32 0.0, %v2125
        %v2127 = vpop.f32.mrb[0].mxu0
        %v2128 = vpop.f32.mrb[0].mxu0
        %v2129 = vpop.f32.mrb[0].mxu0
        %2130 = vdwg.mxu0
        %v2132 = vsel %vm750, %v2085, 0
        %2134 = vmatprep.subr.bf16.mxu0 0
        %2135 = vmatpush1.bf16.msra.mxu0 %v1239
        %2136 = vmatprep.subr.bf16.mxu0 0
        %2137 = vmatpush1.bf16.msra.mxu0 0
        %2138 = vmatprep.subr.bf16.mxu0 0
        %2139 = vmatpush1.bf16.msra.mxu0 0
        %2140 = vmatprep.subr.bf16.mxu0 0
        %2141 = vmatpush1.bf16.msra.mxu0 0
        %2142 = vmatprep.subr.bf16.mxu0 0
        %2143 = vmatpush1.bf16.msra.mxu0 0
        %2144 = vmatprep.subr.bf16.mxu0 0
        %2145 = vmatpush1.bf16.msra.mxu0 0
        %2146 = vmatprep.subr.bf16.mxu0 0
        %2147 = vmatpush1.bf16.msra.mxu0 0
        %2148 = vmatprep.subr.bf16.mxu0 0
        %2149 = vmatpush1.bf16.msra.mxu0 0
        %2150 = vmatprep.subr.bf16.mxu0 0
        %2151 = vmatpush1.bf16.msra.mxu0 0
        %2152 = vmatprep.subr.bf16.mxu0 0
        %2153 = vmatpush1.bf16.msra.mxu0 0
        %2154 = vmatprep.subr.bf16.mxu0 0
        %2155 = vmatpush1.bf16.msra.mxu0 0
        %2156 = vmatprep.subr.bf16.mxu0 0
        %2157 = vmatpush1.bf16.msra.mxu0 0
        %2158 = vmatprep.subr.bf16.mxu0 0
        %2159 = vmatpush1.bf16.msra.mxu0 0
        %2160 = vmatprep.subr.bf16.mxu0 0
        %2161 = vmatpush1.bf16.msra.mxu0 0
        %2162 = vmatprep.subr.bf16.mxu0 0
        %2163 = vmatpush1.bf16.msra.mxu0 0
        %2164 = vmatprep.subr.bf16.mxu0 0
        %2165 = vmatpush1.bf16.msra.mxu0 0
        %2166 = vmatprep.mubr.bf16.mxu0 0
        %2167 = vmatmul.mubr.bf16.gmra.mrb[0].mxu0 %v2132
        %v2168 = vpop.f32.mrb[0].mxu0
        %v2169 = vadd.f32 0.0, %v2168
        %v2170 = vpop.f32.mrb[0].mxu0
        %v2171 = vpop.f32.mrb[0].mxu0
        %v2172 = vpop.f32.mrb[0].mxu0
        %2173 = vdwg.mxu0
        %v2175 = vsel %vm750, %v2086, 0
        %2177 = vmatprep.subr.bf16.mxu0 0
        %2178 = vmatpush1.bf16.msra.mxu0 %v1285
        %2179 = vmatprep.subr.bf16.mxu0 0
        %2180 = vmatpush1.bf16.msra.mxu0 0
        %2181 = vmatprep.subr.bf16.mxu0 0
        %2182 = vmatpush1.bf16.msra.mxu0 0
        %2183 = vmatprep.subr.bf16.mxu0 0
        %2184 = vmatpush1.bf16.msra.mxu0 0
        %2185 = vmatprep.subr.bf16.mxu0 0
        %2186 = vmatpush1.bf16.msra.mxu0 0
        %2187 = vmatprep.subr.bf16.mxu0 0
        %2188 = vmatpush1.bf16.msra.mxu0 0
        %2189 = vmatprep.subr.bf16.mxu0 0
        %2190 = vmatpush1.bf16.msra.mxu0 0
        %2191 = vmatprep.subr.bf16.mxu0 0
        %2192 = vmatpush1.bf16.msra.mxu0 0
        %2193 = vmatprep.subr.bf16.mxu0 0
        %2194 = vmatpush1.bf16.msra.mxu0 0
        %2195 = vmatprep.subr.bf16.mxu0 0
        %2196 = vmatpush1.bf16.msra.mxu0 0
        %2197 = vmatprep.subr.bf16.mxu0 0
        %2198 = vmatpush1.bf16.msra.mxu0 0
        %2199 = vmatprep.subr.bf16.mxu0 0
        %2200 = vmatpush1.bf16.msra.mxu0 0
        %2201 = vmatprep.subr.bf16.mxu0 0
        %2202 = vmatpush1.bf16.msra.mxu0 0
        %2203 = vmatprep.subr.bf16.mxu0 0
        %2204 = vmatpush1.bf16.msra.mxu0 0
        %2205 = vmatprep.subr.bf16.mxu0 0
        %2206 = vmatpush1.bf16.msra.mxu0 0
        %2207 = vmatprep.subr.bf16.mxu0 0
        %2208 = vmatpush1.bf16.msra.mxu0 0
        %2209 = vmatprep.mubr.bf16.mxu0 0
        %2210 = vmatmul.mubr.bf16.gmra.mrb[0].mxu0 %v2175
        %v2211 = vpop.f32.mrb[0].mxu0
        %v2212 = vadd.f32 0.0, %v2211
        %v2213 = vpop.f32.mrb[0].mxu0
        %v2214 = vpop.f32.mrb[0].mxu0
        %v2215 = vpop.f32.mrb[0].mxu0
        %2216 = vdwg.mxu0
        %v2218 = vsel %vm750, %v2087, 0
        %2220 = vmatprep.subr.bf16.mxu0 0
        %2221 = vmatpush1.bf16.msra.mxu0 %v1331
        %2222 = vmatprep.subr.bf16.mxu0 0
        %2223 = vmatpush1.bf16.msra.mxu0 0
        %2224 = vmatprep.subr.bf16.mxu0 0
        %2225 = vmatpush1.bf16.msra.mxu0 0
        %2226 = vmatprep.subr.bf16.mxu0 0
        %2227 = vmatpush1.bf16.msra.mxu0 0
        %2228 = vmatprep.subr.bf16.mxu0 0
        %2229 = vmatpush1.bf16.msra.mxu0 0
        %2230 = vmatprep.subr.bf16.mxu0 0
        %2231 = vmatpush1.bf16.msra.mxu0 0
        %2232 = vmatprep.subr.bf16.mxu0 0
        %2233 = vmatpush1.bf16.msra.mxu0 0
        %2234 = vmatprep.subr.bf16.mxu0 0
        %2235 = vmatpush1.bf16.msra.mxu0 0
        %2236 = vmatprep.subr.bf16.mxu0 0
        %2237 = vmatpush1.bf16.msra.mxu0 0
        %2238 = vmatprep.subr.bf16.mxu0 0
        %2239 = vmatpush1.bf16.msra.mxu0 0
        %2240 = vmatprep.subr.bf16.mxu0 0
        %2241 = vmatpush1.bf16.msra.mxu0 0
        %2242 = vmatprep.subr.bf16.mxu0 0
        %2243 = vmatpush1.bf16.msra.mxu0 0
        %2244 = vmatprep.subr.bf16.mxu0 0
        %2245 = vmatpush1.bf16.msra.mxu0 0
        %2246 = vmatprep.subr.bf16.mxu0 0
        %2247 = vmatpush1.bf16.msra.mxu0 0
        %2248 = vmatprep.subr.bf16.mxu0 0
        %2249 = vmatpush1.bf16.msra.mxu0 0
        %2250 = vmatprep.subr.bf16.mxu0 0
        %2251 = vmatpush1.bf16.msra.mxu0 0
        %2252 = vmatprep.mubr.bf16.mxu0 0
        %2253 = vmatmul.mubr.bf16.gmra.mrb[0].mxu0 %v2218
        %v2254 = vpop.f32.mrb[0].mxu0
        %v2255 = vadd.f32 0.0, %v2254
        %v2256 = vpop.f32.mrb[0].mxu0
        %v2257 = vpop.f32.mrb[0].mxu0
        %v2258 = vpop.f32.mrb[0].mxu0
        %2259 = vdwg.mxu0
        %v2260 = vsel %vm689, %v2126, 0.0
        %v2261 = vsel %vm689, %v2169, 0.0
        %v2262 = vadd.f32 %v2260, %v2261
        %v2263 = vsel %vm689, %v2212, 0.0
        %v2264 = vadd.f32 %v2262, %v2263
        %v2265 = vsel %vm689, %v2255, 0.0
        %v2266 = vadd.f32 %v2264, %v2265
        %v2267 = vadd.f32 %v2266, %v1384
        %v2268 = vadd.f32 %v1589, %v2267
        %v2269 = vsel %vm689, %v2268, 0.0
        %2270 = vadd.xlane.f32.xlu0 %v2269
        %v2271 = vpop.xlane.xlu0 %2270
        %v2272 = vmul.f32 %v2271, %v1391
        %v2273 = vsub.f32 %v2268, %v2272
        %v2274 = vmul.f32 %v2273, %v2273
        %v2275 = vsel %vm689, %v2274, 0.0
        %2276 = vadd.xlane.f32.xlu0 %v2275
        %v2277 = vpop.xlane.xlu0 %2276
        %v2278 = vmul.f32 %v2277, %v1391
        %v2279 = vadd.f32 %v2278, 1e-12
        %v2280 = vrsqrt.pop %v2279
        %v2281 = vmul.f32 %v2273, %v2280
        %v2282 = vmul.f32 %v2281, %v1406
        %v2283 = vadd.f32 %v2282, %v1413
        %v2284 = vpack.c.bf16 %v2283, %v2283
        %v2286 = vsel %vm689, %v2284, 0
        %2288 = vmatprep.subr.bf16.mxu0 0
        %2289 = vmatpush1.bf16.msra.mxu0 %v1431
        %2290 = vmatprep.subr.bf16.mxu0 0
        %2291 = vmatpush1.bf16.msra.mxu0 %v1432
        %2292 = vmatprep.subr.bf16.mxu0 0
        %2293 = vmatpush1.bf16.msra.mxu0 0
        %2294 = vmatprep.subr.bf16.mxu0 0
        %2295 = vmatpush1.bf16.msra.mxu0 0
        %2296 = vmatprep.subr.bf16.mxu0 0
        %2297 = vmatpush1.bf16.msra.mxu0 0
        %2298 = vmatprep.subr.bf16.mxu0 0
        %2299 = vmatpush1.bf16.msra.mxu0 0
        %2300 = vmatprep.subr.bf16.mxu0 0
        %2301 = vmatpush1.bf16.msra.mxu0 0
        %2302 = vmatprep.subr.bf16.mxu0 0
        %2303 = vmatpush1.bf16.msra.mxu0 0
        %2304 = vmatprep.subr.bf16.mxu0 0
        %2305 = vmatpush1.bf16.msra.mxu0 0
        %2306 = vmatprep.subr.bf16.mxu0 0
        %2307 = vmatpush1.bf16.msra.mxu0 0
        %2308 = vmatprep.subr.bf16.mxu0 0
        %2309 = vmatpush1.bf16.msra.mxu0 0
        %2310 = vmatprep.subr.bf16.mxu0 0
        %2311 = vmatpush1.bf16.msra.mxu0 0
        %2312 = vmatprep.subr.bf16.mxu0 0
        %2313 = vmatpush1.bf16.msra.mxu0 0
        %2314 = vmatprep.subr.bf16.mxu0 0
        %2315 = vmatpush1.bf16.msra.mxu0 0
        %2316 = vmatprep.subr.bf16.mxu0 0
        %2317 = vmatpush1.bf16.msra.mxu0 0
        %2318 = vmatprep.subr.bf16.mxu0 0
        %2319 = vmatpush1.bf16.msra.mxu0 0
        %2320 = vmatprep.mubr.bf16.mxu0 0
        %2321 = vmatmul.mubr.bf16.gmra.mrb[0].mxu0 %v2286
        %v2322 = vpop.f32.mrb[0].mxu0
        %v2323 = vadd.f32 %v1421, %v2322
        %v2324 = vpop.f32.mrb[0].mxu0
        %v2325 = vpop.f32.mrb[0].mxu0
        %v2326 = vpop.f32.mrb[0].mxu0
        %2327 = vdwg.mxu0
        %v2328 = vmul.f32 %v2323, 0.5
        %v2329 = vmul.f32 %v2323, 0.044715
        %v2330 = vmul.f32 %v2329, %v2323
        %v2331 = vmul.f32 %v2330, %v2323
        %v2332 = vadd.f32 %v2323, %v2331
        %v2333 = vmul.f32 %v2332, 0.7978846
        %v2334 = vtanh.pop %v2333
        %v2335 = vadd.f32 %v2334, 1.0
        %v2336 = vmul.f32 %v2328, %v2335
        %v2337 = vpack.c.bf16 %v2336, %v2336
        %v2339 = vsel %vm1518, %v2337, 0
        %2341 = vmatprep.subr.bf16.mxu0 0
        %2342 = vmatpush1.bf16.msra.mxu0 %v1510
        %2343 = vmatprep.subr.bf16.mxu0 0
        %2344 = vmatpush1.bf16.msra.mxu0 %v1511
        %2345 = vmatprep.subr.bf16.mxu0 0
        %2346 = vmatpush1.bf16.msra.mxu0 %v1512
        %2347 = vmatprep.subr.bf16.mxu0 0
        %2348 = vmatpush1.bf16.msra.mxu0 %v1513
        %2349 = vmatprep.subr.bf16.mxu0 0
        %2350 = vmatpush1.bf16.msra.mxu0 0
        %2351 = vmatprep.subr.bf16.mxu0 0
        %2352 = vmatpush1.bf16.msra.mxu0 0
        %2353 = vmatprep.subr.bf16.mxu0 0
        %2354 = vmatpush1.bf16.msra.mxu0 0
        %2355 = vmatprep.subr.bf16.mxu0 0
        %2356 = vmatpush1.bf16.msra.mxu0 0
        %2357 = vmatprep.subr.bf16.mxu0 0
        %2358 = vmatpush1.bf16.msra.mxu0 0
        %2359 = vmatprep.subr.bf16.mxu0 0
        %2360 = vmatpush1.bf16.msra.mxu0 0
        %2361 = vmatprep.subr.bf16.mxu0 0
        %2362 = vmatpush1.bf16.msra.mxu0 0
        %2363 = vmatprep.subr.bf16.mxu0 0
        %2364 = vmatpush1.bf16.msra.mxu0 0
        %2365 = vmatprep.subr.bf16.mxu0 0
        %2366 = vmatpush1.bf16.msra.mxu0 0
        %2367 = vmatprep.subr.bf16.mxu0 0
        %2368 = vmatpush1.bf16.msra.mxu0 0
        %2369 = vmatprep.subr.bf16.mxu0 0
        %2370 = vmatpush1.bf16.msra.mxu0 0
        %2371 = vmatprep.subr.bf16.mxu0 0
        %2372 = vmatpush1.bf16.msra.mxu0 0
        %2373 = vmatprep.mubr.bf16.mxu0 0
        %2374 = vmatmul.mubr.bf16.gmra.mrb[0].mxu0 %v2339
        %v2375 = vpop.f32.mrb[0].mxu0
        %v2376 = vadd.f32 %v1492, %v2375
        %v2377 = vpop.f32.mrb[0].mxu0
        %v2378 = vpop.f32.mrb[0].mxu0
        %v2379 = vpop.f32.mrb[0].mxu0
        %2380 = vdwg.mxu0
        %v2381 = vadd.f32 %v2283, %v2376
        %v2382 = vsel %vm689, %v2381, 0.0
        %2383 = vadd.xlane.f32.xlu0 %v2382
        %v2384 = vpop.xlane.xlu0 %2383
        %v2385 = vmul.f32 %v2384, %v1391
        %v2386 = vsub.f32 %v2381, %v2385
        %v2387 = vmul.f32 %v2386, %v2386
        %v2388 = vsel %vm689, %v2387, 0.0
        %2389 = vadd.xlane.f32.xlu0 %v2388
        %v2390 = vpop.xlane.xlu0 %2389
        %v2391 = vmul.f32 %v2390, %v1391
        %v2392 = vadd.f32 %v2391, 1e-12
        %v2393 = vrsqrt.pop %v2392
        %v2394 = vmul.f32 %v2386, %v2393
        %v2395 = vmul.f32 %v2394, %v1580
        %v2396 = vadd.f32 %v2395, %v1587
        %2397 = vst.msk [vmem:[%s575] sm:$0xff] %vm689, %v2396
        %s2398 = sand.u32 %s361, 1
        %s2399 = scalar_lea.sflag [#allocation4], %s2398
        %s2400 = sand.u32 %s361, 1
        %s2401 = smul.addr %s2400, 8
        %s2402 = scalar_lea.vmem [#allocation14], %s2401
        // Predicated region
        $region109: #{albert_transformer_forward.1} parent=79 // pred_check
          %p2403 = pneg %p371
        $region110: #{albert_transformer_forward.1} parent=79 // pred_check_branch
          %2405 = sbr.rel (%p2403) target = $region112
        $region111: #{albert_transformer_forward.1} parent=79 // pred_region
          %s2407 = ssub.s32 128, 128
          %2408 = vsyncadd %s2399, %s2407
          %s2409 = smul.addr %s33, 128
          %s2410 = scalar_lea.hbm %s15, %s2409
          %s2412 = sshll.u32 %s2402, 4
          %s2413 = int_to_ptr.vmem [resolvable:$true] %s2412
          %2415 = dma.vmem_to_hbm [thread:$0]  %s2413, 128, %s2410, %s2399
        $region112: #{albert_transformer_forward.1} parent=79 // pred_fallthru
          _
      $region80: #{albert_transformer_forward.1} parent=5 // pred_fallthru
        _
      %p2416 = scmp.le.s32.totalorder 2, %s28
      // Predicated region
      $region113: #{albert_transformer_forward.1} parent=5 // pred_check
        %p2417 = pneg %p2416
      $region114: #{albert_transformer_forward.1} parent=5 // pred_check_branch
        %2419 = sbr.rel (%p2417) target = $region116
      $region115: #{albert_transformer_forward.1} parent=5 // pred_region
        %s2420 = ssub.s32 %s28, 2
        // Predicated region
        $region117: #{albert_transformer_forward.1} parent=115 // pred_check
          %p2421 = pneg %p377
        $region118: #{albert_transformer_forward.1} parent=115 // pred_check_branch
          %2423 = sbr.rel (%p2421) target = $region120
        $region119: #{albert_transformer_forward.1} parent=115 // pred_region
          %s2424 = sand.u32 %s362, 1
          %s2425 = scalar_lea.sflag [#allocation4], %s2424
          %s2426 = sand.u32 %s362, 1
          %s2427 = smul.addr %s2426, 8
          %s2428 = scalar_lea.vmem [#allocation14], %s2427
          %2429 = dma.done %s2425, 128
        $region120: #{albert_transformer_forward.1} parent=115 // pred_fallthru
          _
      $region116: #{albert_transformer_forward.1} parent=5 // pred_fallthru
        _
    $region6: #{albert_transformer_forward.1} parent=1 // loop_footer
      %s32 = sadd.s32 1, %s28
    $region7: #{albert_transformer_forward.1} parent=1 // loop_footer_branch
      %27 = sbr.rel target = $region3
    $region8: #{albert_transformer_forward.1} parent=1 // loop_exit
      _
    %2430 = vsyncpa [#allocation3], 1
    %s2431 = scalar_lea.sflag [#allocation3], 1
    %2432 = vsyncpa %s2431, 1
    %2433 = vsyncpa [#allocation6], 1
    %2434 = vsyncpa [#allocation9], 1
    %2435 = vsyncpa [#allocation12], 1
    %2436 = vsyncpa [#allocation4], 1
    %s2437 = scalar_lea.sflag [#allocation4], 1
    %2438 = vsyncpa %s2437, 1

</llo_original>
